<compile_context>
chip_gen: v7x
topology: tpu7x:2x2x1
jax: 0.10.0
libtpu: 0.0.40
codegen_flags: <defaults>
</compile_context>

<pallas_src>
import functools
import math

import jax
import jax.numpy as jnp
from jax import lax
from jax.experimental import pallas as pl
from jax.experimental.pallas import tpu as pltpu


def _mha_kernel(xq_ref, xk_ref, xv_ref,
                wq_ref, wk_ref, wv_ref, wo_ref,
                bq_ref, bk_ref, bv_ref, bo_ref,
                out_ref, attn_ref,
                qp_ref, kp_ref, vp_ref,
                *, num_heads, d_k, block_q, masksize, sm_scale):
    qi = pl.program_id(1)
    S = kp_ref.shape[0]

    # Hoisted Q/K/V projections: one full-width [S,D]@[D,D] matmul each,
    # computed once per batch element (qi == 0) and kept resident in bf16 VMEM
    # scratch across the query tiles.
    @pl.when(qi == 0)
    def _():
        xq = xq_ref[0].astype(jnp.bfloat16)          # (S, D)
        xk = xk_ref[0].astype(jnp.bfloat16)
        xv = xv_ref[0].astype(jnp.bfloat16)
        qp_ref[...] = (jnp.dot(xq, wq_ref[...], preferred_element_type=jnp.float32)
                       + bq_ref[...]).astype(jnp.bfloat16)
        kp_ref[...] = (jnp.dot(xk, wk_ref[...], preferred_element_type=jnp.float32)
                       + bk_ref[...]).astype(jnp.bfloat16)
        vp_ref[...] = (jnp.dot(xv, wv_ref[...], preferred_element_type=jnp.float32)
                       + bv_ref[...]).astype(jnp.bfloat16)

    q_row0 = pl.multiple_of(qi * block_q, block_q)
    q_tile = qp_ref[pl.ds(q_row0, block_q), :]       # (tq, D) bf16
    k_all = kp_ref[...]                              # (S, D) bf16
    v_all = vp_ref[...]                              # (S, D) bf16

    if masksize != 1:
        m = masksize // 2
        row = lax.broadcasted_iota(jnp.int32, (block_q, S), 0) + q_row0
        col = lax.broadcasted_iota(jnp.int32, (block_q, S), 1)
        band = jnp.abs(col - row) <= m               # hoisted out of head loop

    ctx_parts = []
    for h in range(num_heads):                       # static unroll (H is static)
        lo = h * d_k
        qh = q_tile[:, lo:lo + d_k]                  # static lane slices
        kh = k_all[:, lo:lo + d_k]
        vh = v_all[:, lo:lo + d_k]

        # scores = q @ k^T / sqrt(d_k)   (bf16 operands, f32 accumulation)
        scores = lax.dot_general(qh, kh, (((1,), (1,)), ((), ())),
                                 preferred_element_type=jnp.float32) * sm_scale
        if masksize != 1:
            scores = jnp.where(band, scores, jnp.float32(-1e9))

        # numerically stable softmax (f32); reciprocal on the EUP slot.
        scores = scores - jnp.max(scores, axis=-1, keepdims=True)
        e = jnp.exp(scores)
        p = e * pl.reciprocal(jnp.sum(e, axis=-1, keepdims=True), approx=True)
        # TODO(synk): training-mode nn.Dropout on the attention probabilities is
        # omitted (eval-mode identity).

        attn_ref[0, h] = p.astype(attn_ref.dtype)

        ctx_parts.append(
            jnp.dot(p.astype(jnp.bfloat16), vh,
                    preferred_element_type=jnp.float32).astype(jnp.bfloat16))

    # Single full-K output projection for this query tile.
    ctx = jnp.concatenate(ctx_parts, axis=-1)        # (tq, D) bf16
    out = jnp.dot(ctx, wo_ref[...], preferred_element_type=jnp.float32) + bo_ref[...]
    out_ref[0] = out.astype(out_ref.dtype)


def _pick_block_q(S):
    if S <= 512:
        return S
    for cand in (512, 256, 128):
        if S % cand == 0:
            return cand
    return S


def multi_head_attention(query, key, value, params, *, num_heads, masksize=1):
    """Fused MHA forward. Weights in math orientation: y = x @ W + b."""
    Wq, bq, Wk, bk, Wv, bv, Wo, bo = params
    B, S, D = query.shape
    assert key.shape == (B, S, D) and value.shape == (B, S, D)
    assert D % num_heads == 0
    H = num_heads
    dk = D // H

    block_q = _pick_block_q(S)
    nq = S // block_q

    # bf16 weights (halves weight DMA + VMEM); biases stay f32.
    wq = Wq.astype(jnp.bfloat16)
    wk = Wk.astype(jnp.bfloat16)
    wv = Wv.astype(jnp.bfloat16)
    wo = Wo.astype(jnp.bfloat16)
    bq2 = bq.reshape(1, D)
    bk2 = bk.reshape(1, D)
    bv2 = bv.reshape(1, D)
    bo2 = bo.reshape(1, D)

    kernel = functools.partial(_mha_kernel,
                               num_heads=H, d_k=dk, block_q=block_q,
                               masksize=int(masksize),
                               sm_scale=float(1.0 / math.sqrt(dk)))

    x_spec = pl.BlockSpec((1, S, D), lambda b, qi: (b, 0, 0))
    w_spec = pl.BlockSpec((D, D), lambda b, qi: (0, 0))
    b_spec = pl.BlockSpec((1, D), lambda b, qi: (0, 0))

    flops = int(B * (8 * S * D * D + 4 * S * S * D))
    bytes_accessed = int(4 * (4 * B * S * D + 4 * D + B * H * S * S)
                         + 2 * 4 * D * D)
    cost = pl.CostEstimate(flops=flops,
                           transcendentals=int(B * H * S * S),
                           bytes_accessed=bytes_accessed)

    out, attn = pl.pallas_call(
        kernel,
        out_shape=(jax.ShapeDtypeStruct((B, S, D), query.dtype),
                   jax.ShapeDtypeStruct((B, H, S, S), jnp.float32)),
        grid_spec=pltpu.PrefetchScalarGridSpec(
            num_scalar_prefetch=0,
            grid=(B, nq),
            in_specs=[x_spec, x_spec, x_spec,
                      w_spec, w_spec, w_spec, w_spec,
                      b_spec, b_spec, b_spec, b_spec],
            out_specs=[pl.BlockSpec((1, block_q, D), lambda b, qi: (b, qi, 0)),
                       pl.BlockSpec((1, H, block_q, S), lambda b, qi: (b, 0, qi, 0))],
            scratch_shapes=[pltpu.VMEM((S, D), jnp.bfloat16),   # Q projection
                            pltpu.VMEM((S, D), jnp.bfloat16),   # K projection
                            pltpu.VMEM((S, D), jnp.bfloat16)]), # V projection
        compiler_params=pltpu.CompilerParams(
            dimension_semantics=("parallel", "arbitrary"),
            vmem_limit_bytes=64 * 1024 * 1024),
        cost_estimate=cost,
    )(query, key, value, wq, wk, wv, wo, bq2, bk2, bv2, bo2)

    return out, attn


def mha_reference(query, key, value, params, *, num_heads, masksize=1):
    """Pure-JAX reference (high precision matmuls)."""
    Wq, bq, Wk, bk, Wv, bv, Wo, bo = params
    B, S, D = query.shape
    dk = D // num_heads
    hp = lax.Precision.HIGHEST

    def proj(x, W, b):
        y = jnp.einsum('bsd,de->bse', x, W, precision=hp) + b
        return y.reshape(B, S, num_heads, dk).transpose(0, 2, 1, 3)

    q = proj(query, Wq, bq)
    k = proj(key, Wk, bk)
    v = proj(value, Wv, bv)
    scores = jnp.einsum('bhqd,bhkd->bhqk', q, k, precision=hp) / math.sqrt(dk)
    if masksize != 1:
        m = masksize // 2
        i = jnp.arange(S)[:, None]
        j = jnp.arange(S)[None, :]
        scores = jnp.where(jnp.abs(j - i) <= m, scores, -1e9)
    p = jax.nn.softmax(scores, axis=-1)
    ctx = jnp.einsum('bhqk,bhkd->bhqd', p, v, precision=hp)
    ctx = ctx.transpose(0, 2, 1, 3).reshape(B, S, D)
    out = jnp.einsum('bsd,de->bse', ctx, Wo, precision=hp) + bo
    return out, p


if __name__ == "__main__":
    B, S, D, H = 2, 8, 32, 4          # batch=2, seq=8, d_model=32, heads=4 (d_k=8)

    key0 = jax.random.PRNGKey(0)
    ks = jax.random.split(key0, 11)
    query = jax.random.normal(ks[0], (B, S, D), dtype=jnp.float32)
    key_x = jax.random.normal(ks[1], (B, S, D), dtype=jnp.float32)
    value = jax.random.normal(ks[2], (B, S, D), dtype=jnp.float32)

    sc = 1.0 / math.sqrt(D)
    Wq = jax.random.normal(ks[3], (D, D), dtype=jnp.float32) * sc
    Wk = jax.random.normal(ks[4], (D, D), dtype=jnp.float32) * sc
    Wv = jax.random.normal(ks[5], (D, D), dtype=jnp.float32) * sc
    Wo = jax.random.normal(ks[6], (D, D), dtype=jnp.float32) * sc
    bq = jax.random.normal(ks[7], (D,), dtype=jnp.float32) * 0.1
    bk = jax.random.normal(ks[8], (D,), dtype=jnp.float32) * 0.1
    bv = jax.random.normal(ks[9], (D,), dtype=jnp.float32) * 0.1
    bo = jax.random.normal(ks[10], (D,), dtype=jnp.float32) * 0.1
    params = (Wq, bq, Wk, bk, Wv, bv, Wo, bo)

    # Exercise both the default (masksize=1, no mask) and the banded-mask path.
    for masksize in (1, 4):
        out, attn = multi_head_attention(query, key_x, value, params,
                                         num_heads=H, masksize=masksize)
        out, attn = jax.block_until_ready((out, attn))

        assert out.shape == (B, S, D)
        assert attn.shape == (B, H, S, S)
        assert bool(jnp.all(jnp.isfinite(out)))
        assert bool(jnp.all(jnp.isfinite(attn)))

        ref_out, ref_attn = mha_reference(query, key_x, value, params,
                                          num_heads=H, masksize=masksize)
        # bf16 MXU operands + approx reciprocal -> slightly looser tolerance on out.
        assert bool(jnp.allclose(attn, ref_attn, atol=2e-2, rtol=2e-2))
        assert bool(jnp.allclose(out, ref_out, atol=3e-2, rtol=3e-2))

    print("KERNEL_OK")
</pallas_src>

<mosaic_0001>
module attributes {stable_mosaic.version = 11 : i64} {
  func.func @_mha_kernel(%arg0: i32, %arg1: i32, %arg2: memref<1x8x32xf32, #tpu.memory_space<vmem>>, %arg3: memref<1x8x32xf32, #tpu.memory_space<vmem>>, %arg4: memref<1x8x32xf32, #tpu.memory_space<vmem>>, %arg5: memref<32x32xbf16, #tpu.memory_space<vmem>>, %arg6: memref<32x32xbf16, #tpu.memory_space<vmem>>, %arg7: memref<32x32xbf16, #tpu.memory_space<vmem>>, %arg8: memref<32x32xbf16, #tpu.memory_space<vmem>>, %arg9: memref<1x32xf32, #tpu.memory_space<vmem>>, %arg10: memref<1x32xf32, #tpu.memory_space<vmem>>, %arg11: memref<1x32xf32, #tpu.memory_space<vmem>>, %arg12: memref<1x32xf32, #tpu.memory_space<vmem>>, %arg13: memref<1x8x32xf32, #tpu.memory_space<vmem>>, %arg14: memref<1x4x8x8xf32, #tpu.memory_space<vmem>>, %arg15: memref<8x32xbf16, #tpu.memory_space<vmem>>, %arg16: memref<8x32xbf16, #tpu.memory_space<vmem>>, %arg17: memref<8x32xbf16, #tpu.memory_space<vmem>>) attributes {dimension_semantics = [#tpu.dimension_semantics<parallel>, #tpu.dimension_semantics<arbitrary>], iteration_bounds = array<i64: 2, 1>, scalar_prefetch = 0 : i64, scratch_operands = 3 : i64, tpu.core_type = #tpu.core_type<tc>, window_params = [{transform_indices = @transform_0, window_bounds = array<i64: 1, 8, 32>}, {transform_indices = @transform_1, window_bounds = array<i64: 1, 8, 32>}, {transform_indices = @transform_2, window_bounds = array<i64: 1, 8, 32>}, {pipeline_mode = #tpu.pipeline_mode<synchronous>, transform_indices = @transform_3, window_bounds = array<i64: 32, 32>}, {pipeline_mode = #tpu.pipeline_mode<synchronous>, transform_indices = @transform_4, window_bounds = array<i64: 32, 32>}, {pipeline_mode = #tpu.pipeline_mode<synchronous>, transform_indices = @transform_5, window_bounds = array<i64: 32, 32>}, {pipeline_mode = #tpu.pipeline_mode<synchronous>, transform_indices = @transform_6, window_bounds = array<i64: 32, 32>}, {pipeline_mode = #tpu.pipeline_mode<synchronous>, transform_indices = @transform_7, window_bounds = array<i64: 1, 32>}, {pipeline_mode = #tpu.pipeline_mode<synchronous>, transform_indices = @transform_8, window_bounds = array<i64: 1, 32>}, {pipeline_mode = #tpu.pipeline_mode<synchronous>, transform_indices = @transform_9, window_bounds = array<i64: 1, 32>}, {pipeline_mode = #tpu.pipeline_mode<synchronous>, transform_indices = @transform_10, window_bounds = array<i64: 1, 32>}, {transform_indices = @transform_11, window_bounds = array<i64: 1, 8, 32>}, {transform_indices = @transform_12, window_bounds = array<i64: 1, 4, 8, 8>}]} {
    %c0_i32 = arith.constant 0 : i32
    %0 = arith.cmpi eq, %arg1, %c0_i32 : i32
    %1 = arith.extui %0 : i1 to i32
    %c0_i32_0 = arith.constant 0 : i32
    %2 = arith.cmpi ne, %1, %c0_i32_0 : i32
    scf.if %2 {
      %c0_45 = arith.constant 0 : index
      %c0_46 = arith.constant 0 : index
      %c0_47 = arith.constant 0 : index
      %106 = vector.load %arg2[%c0_45, %c0_46, %c0_47] : memref<1x8x32xf32, #tpu.memory_space<vmem>>, vector<1x8x32xf32>
      %107 = vector.shape_cast %106 : vector<1x8x32xf32> to vector<8x32xf32>
      %108 = arith.truncf %107 : vector<8x32xf32> to vector<8x32xbf16>
      %c0_48 = arith.constant 0 : index
      %c0_49 = arith.constant 0 : index
      %c0_50 = arith.constant 0 : index
      %109 = vector.load %arg3[%c0_48, %c0_49, %c0_50] : memref<1x8x32xf32, #tpu.memory_space<vmem>>, vector<1x8x32xf32>
      %110 = vector.shape_cast %109 : vector<1x8x32xf32> to vector<8x32xf32>
      %111 = arith.truncf %110 : vector<8x32xf32> to vector<8x32xbf16>
      %c0_51 = arith.constant 0 : index
      %c0_52 = arith.constant 0 : index
      %c0_53 = arith.constant 0 : index
      %112 = vector.load %arg4[%c0_51, %c0_52, %c0_53] : memref<1x8x32xf32, #tpu.memory_space<vmem>>, vector<1x8x32xf32>
      %113 = vector.shape_cast %112 : vector<1x8x32xf32> to vector<8x32xf32>
      %114 = arith.truncf %113 : vector<8x32xf32> to vector<8x32xbf16>
      %c0_54 = arith.constant 0 : index
      %c0_55 = arith.constant 0 : index
      %115 = vector.load %arg5[%c0_54, %c0_55] : memref<32x32xbf16, #tpu.memory_space<vmem>>, vector<32x32xbf16>
      %cst_56 = arith.constant dense<0.000000e+00> : vector<8x32xf32>
      %116 = tpu.matmul %108, %115, %cst_56 {dimension_numbers = #tpu.dot_dimension_numbers<[1], [0], [0], [1], [0, 0, 1, 1], [], []>} : vector<8x32xbf16>, vector<32x32xbf16>, vector<8x32xf32> -> vector<8x32xf32>
      %c0_57 = arith.constant 0 : index
      %c0_58 = arith.constant 0 : index
      %117 = vector.load %arg9[%c0_57, %c0_58] : memref<1x32xf32, #tpu.memory_space<vmem>>, vector<1x32xf32>
      %118 = vector.broadcast %117 : vector<1x32xf32> to vector<8x32xf32>
      %119 = arith.addf %116, %118 : vector<8x32xf32>
      %120 = arith.truncf %119 : vector<8x32xf32> to vector<8x32xbf16>
      %c0_59 = arith.constant 0 : index
      %c0_60 = arith.constant 0 : index
      %121 = vector.load %arg15[%c0_59, %c0_60] : memref<8x32xbf16, #tpu.memory_space<vmem>>, vector<8x32xbf16>
      tpu.vector_store %arg15[%c0_59, %c0_60], %120 {strides = array<i32>} : memref<8x32xbf16, #tpu.memory_space<vmem>>, vector<8x32xbf16>,
      %c0_61 = arith.constant 0 : index
      %c0_62 = arith.constant 0 : index
      %122 = vector.load %arg6[%c0_61, %c0_62] : memref<32x32xbf16, #tpu.memory_space<vmem>>, vector<32x32xbf16>
      %cst_63 = arith.constant dense<0.000000e+00> : vector<8x32xf32>
      %123 = tpu.matmul %111, %122, %cst_63 {dimension_numbers = #tpu.dot_dimension_numbers<[1], [0], [0], [1], [0, 0, 1, 1], [], []>} : vector<8x32xbf16>, vector<32x32xbf16>, vector<8x32xf32> -> vector<8x32xf32>
      %c0_64 = arith.constant 0 : index
      %c0_65 = arith.constant 0 : index
      %124 = vector.load %arg10[%c0_64, %c0_65] : memref<1x32xf32, #tpu.memory_space<vmem>>, vector<1x32xf32>
      %125 = vector.broadcast %124 : vector<1x32xf32> to vector<8x32xf32>
      %126 = arith.addf %123, %125 : vector<8x32xf32>
      %127 = arith.truncf %126 : vector<8x32xf32> to vector<8x32xbf16>
      %c0_66 = arith.constant 0 : index
      %c0_67 = arith.constant 0 : index
      %128 = vector.load %arg16[%c0_66, %c0_67] : memref<8x32xbf16, #tpu.memory_space<vmem>>, vector<8x32xbf16>
      tpu.vector_store %arg16[%c0_66, %c0_67], %127 {strides = array<i32>} : memref<8x32xbf16, #tpu.memory_space<vmem>>, vector<8x32xbf16>,
      %c0_68 = arith.constant 0 : index
      %c0_69 = arith.constant 0 : index
      %129 = vector.load %arg7[%c0_68, %c0_69] : memref<32x32xbf16, #tpu.memory_space<vmem>>, vector<32x32xbf16>
      %cst_70 = arith.constant dense<0.000000e+00> : vector<8x32xf32>
      %130 = tpu.matmul %114, %129, %cst_70 {dimension_numbers = #tpu.dot_dimension_numbers<[1], [0], [0], [1], [0, 0, 1, 1], [], []>} : vector<8x32xbf16>, vector<32x32xbf16>, vector<8x32xf32> -> vector<8x32xf32>
      %c0_71 = arith.constant 0 : index
      %c0_72 = arith.constant 0 : index
      %131 = vector.load %arg11[%c0_71, %c0_72] : memref<1x32xf32, #tpu.memory_space<vmem>>, vector<1x32xf32>
      %132 = vector.broadcast %131 : vector<1x32xf32> to vector<8x32xf32>
      %133 = arith.addf %130, %132 : vector<8x32xf32>
      %134 = arith.truncf %133 : vector<8x32xf32> to vector<8x32xbf16>
      %c0_73 = arith.constant 0 : index
      %c0_74 = arith.constant 0 : index
      %135 = vector.load %arg17[%c0_73, %c0_74] : memref<8x32xbf16, #tpu.memory_space<vmem>>, vector<8x32xbf16>
      tpu.vector_store %arg17[%c0_73, %c0_74], %134 {strides = array<i32>} : memref<8x32xbf16, #tpu.memory_space<vmem>>, vector<8x32xbf16>,
    } else {
    }
    %c8_i32 = arith.constant 8 : i32
    %3 = arith.muli %arg1, %c8_i32 : i32
    %4 = tpu.assume_multiple %3, 8 : i32
    %5 = arith.index_cast %4 : i32 to index
    %c0 = arith.constant 0 : index
    %6 = vector.load %arg15[%5, %c0] : memref<8x32xbf16, #tpu.memory_space<vmem>>, vector<8x32xbf16>
    %c0_1 = arith.constant 0 : index
    %c0_2 = arith.constant 0 : index
    %7 = vector.load %arg16[%c0_1, %c0_2] : memref<8x32xbf16, #tpu.memory_space<vmem>>, vector<8x32xbf16>
    %c0_3 = arith.constant 0 : index
    %c0_4 = arith.constant 0 : index
    %8 = vector.load %arg17[%c0_3, %c0_4] : memref<8x32xbf16, #tpu.memory_space<vmem>>, vector<8x32xbf16>
    %9 = vector.extract_strided_slice %6 {offsets = [0, 0], sizes = [8, 8], strides = [1, 1]} : vector<8x32xbf16> to vector<8x8xbf16>
    %10 = vector.extract_strided_slice %7 {offsets = [0, 0], sizes = [8, 8], strides = [1, 1]} : vector<8x32xbf16> to vector<8x8xbf16>
    %11 = vector.extract_strided_slice %8 {offsets = [0, 0], sizes = [8, 8], strides = [1, 1]} : vector<8x32xbf16> to vector<8x8xbf16>
    %cst = arith.constant dense<0.000000e+00> : vector<8x8xf32>
    %12 = tpu.matmul %9, %10, %cst {dimension_numbers = #tpu.dot_dimension_numbers<[1], [1], [0], [0], [0, 0, 1, 0], [], []>} : vector<8x8xbf16>, vector<8x8xbf16>, vector<8x8xf32> -> vector<8x8xf32>
    %cst_5 = arith.constant 0.353553385 : f32
    %13 = vector.broadcast %cst_5 : f32 to vector<8x8xf32>
    %14 = arith.mulf %12, %13 : vector<8x8xf32>
    %cst_6 = arith.constant dense<0xFF800000> : vector<8xf32>
    %15 = vector.multi_reduction <maximumf>, %14, %cst_6 [1] : vector<8x8xf32> to vector<8xf32>
    %16 = vector.shape_cast %15 : vector<8xf32> to vector<8x1xf32>
    %17 = vector.broadcast %16 : vector<8x1xf32> to vector<8x8xf32>
    %18 = arith.subf %14, %17 : vector<8x8xf32>
    %19 = math.exp %18 : vector<8x8xf32>
    %cst_7 = arith.constant dense<0.000000e+00> : vector<8xf32>
    %20 = vector.multi_reduction <add>, %19, %cst_7 [1] : vector<8x8xf32> to vector<8xf32>
    %21 = vector.shape_cast %20 : vector<8xf32> to vector<8x1xf32>
    %22 = tpu.reciprocal %21 {approx = true} : vector<8x1xf32> -> vector<8x1xf32>
    %23 = vector.broadcast %22 : vector<8x1xf32> to vector<8x8xf32>
    %24 = arith.mulf %19, %23 : vector<8x8xf32>
    %c0_8 = arith.constant 0 : index
    %c0_9 = arith.constant 0 : index
    %c0_10 = arith.constant 0 : index
    %c0_11 = arith.constant 0 : index
    %25 = vector.load %arg14[%c0_8, %c0_9, %c0_10, %c0_11] : memref<1x4x8x8xf32, #tpu.memory_space<vmem>>, vector<1x1x8x8xf32>
    %26 = vector.shape_cast %25 : vector<1x1x8x8xf32> to vector<8x8xf32>
    %27 = vector.shape_cast %24 : vector<8x8xf32> to vector<1x1x8x8xf32>
    tpu.vector_store %arg14[%c0_8, %c0_9, %c0_10, %c0_11], %27 {strides = array<i32>} : memref<1x4x8x8xf32, #tpu.memory_space<vmem>>, vector<1x1x8x8xf32>,
    %28 = arith.truncf %24 : vector<8x8xf32> to vector<8x8xbf16>
    %cst_12 = arith.constant dense<0.000000e+00> : vector<8x8xf32>
    %29 = tpu.matmul %28, %11, %cst_12 {dimension_numbers = #tpu.dot_dimension_numbers<[1], [0], [0], [1], [0, 0, 1, 1], [], []>} : vector<8x8xbf16>, vector<8x8xbf16>, vector<8x8xf32> -> vector<8x8xf32>
    %30 = arith.truncf %29 : vector<8x8xf32> to vector<8x8xbf16>
    %31 = vector.extract_strided_slice %6 {offsets = [0, 8], sizes = [8, 8], strides = [1, 1]} : vector<8x32xbf16> to vector<8x8xbf16>
    %32 = vector.extract_strided_slice %7 {offsets = [0, 8], sizes = [8, 8], strides = [1, 1]} : vector<8x32xbf16> to vector<8x8xbf16>
    %33 = vector.extract_strided_slice %8 {offsets = [0, 8], sizes = [8, 8], strides = [1, 1]} : vector<8x32xbf16> to vector<8x8xbf16>
    %cst_13 = arith.constant dense<0.000000e+00> : vector<8x8xf32>
    %34 = tpu.matmul %31, %32, %cst_13 {dimension_numbers = #tpu.dot_dimension_numbers<[1], [1], [0], [0], [0, 0, 1, 0], [], []>} : vector<8x8xbf16>, vector<8x8xbf16>, vector<8x8xf32> -> vector<8x8xf32>
    %cst_14 = arith.constant 0.353553385 : f32
    %35 = vector.broadcast %cst_14 : f32 to vector<8x8xf32>
    %36 = arith.mulf %34, %35 : vector<8x8xf32>
    %cst_15 = arith.constant dense<0xFF800000> : vector<8xf32>
    %37 = vector.multi_reduction <maximumf>, %36, %cst_15 [1] : vector<8x8xf32> to vector<8xf32>
    %38 = vector.shape_cast %37 : vector<8xf32> to vector<8x1xf32>
    %39 = vector.broadcast %38 : vector<8x1xf32> to vector<8x8xf32>
    %40 = arith.subf %36, %39 : vector<8x8xf32>
    %41 = math.exp %40 : vector<8x8xf32>
    %cst_16 = arith.constant dense<0.000000e+00> : vector<8xf32>
    %42 = vector.multi_reduction <add>, %41, %cst_16 [1] : vector<8x8xf32> to vector<8xf32>
    %43 = vector.shape_cast %42 : vector<8xf32> to vector<8x1xf32>
    %44 = tpu.reciprocal %43 {approx = true} : vector<8x1xf32> -> vector<8x1xf32>
    %45 = vector.broadcast %44 : vector<8x1xf32> to vector<8x8xf32>
    %46 = arith.mulf %41, %45 : vector<8x8xf32>
    %c0_17 = arith.constant 0 : index
    %c1 = arith.constant 1 : index
    %c0_18 = arith.constant 0 : index
    %c0_19 = arith.constant 0 : index
    %47 = vector.load %arg14[%c0_17, %c1, %c0_18, %c0_19] : memref<1x4x8x8xf32, #tpu.memory_space<vmem>>, vector<1x1x8x8xf32>
    %48 = vector.shape_cast %47 : vector<1x1x8x8xf32> to vector<8x8xf32>
    %49 = vector.shape_cast %46 : vector<8x8xf32> to vector<1x1x8x8xf32>
    tpu.vector_store %arg14[%c0_17, %c1, %c0_18, %c0_19], %49 {strides = array<i32>} : memref<1x4x8x8xf32, #tpu.memory_space<vmem>>, vector<1x1x8x8xf32>,
    %50 = arith.truncf %46 : vector<8x8xf32> to vector<8x8xbf16>
    %cst_20 = arith.constant dense<0.000000e+00> : vector<8x8xf32>
    %51 = tpu.matmul %50, %33, %cst_20 {dimension_numbers = #tpu.dot_dimension_numbers<[1], [0], [0], [1], [0, 0, 1, 1], [], []>} : vector<8x8xbf16>, vector<8x8xbf16>, vector<8x8xf32> -> vector<8x8xf32>
    %52 = arith.truncf %51 : vector<8x8xf32> to vector<8x8xbf16>
    %53 = vector.extract_strided_slice %6 {offsets = [0, 16], sizes = [8, 8], strides = [1, 1]} : vector<8x32xbf16> to vector<8x8xbf16>
    %54 = vector.extract_strided_slice %7 {offsets = [0, 16], sizes = [8, 8], strides = [1, 1]} : vector<8x32xbf16> to vector<8x8xbf16>
    %55 = vector.extract_strided_slice %8 {offsets = [0, 16], sizes = [8, 8], strides = [1, 1]} : vector<8x32xbf16> to vector<8x8xbf16>
    %cst_21 = arith.constant dense<0.000000e+00> : vector<8x8xf32>
    %56 = tpu.matmul %53, %54, %cst_21 {dimension_numbers = #tpu.dot_dimension_numbers<[1], [1], [0], [0], [0, 0, 1, 0], [], []>} : vector<8x8xbf16>, vector<8x8xbf16>, vector<8x8xf32> -> vector<8x8xf32>
    %cst_22 = arith.constant 0.353553385 : f32
    %57 = vector.broadcast %cst_22 : f32 to vector<8x8xf32>
    %58 = arith.mulf %56, %57 : vector<8x8xf32>
    %cst_23 = arith.constant dense<0xFF800000> : vector<8xf32>
    %59 = vector.multi_reduction <maximumf>, %58, %cst_23 [1] : vector<8x8xf32> to vector<8xf32>
    %60 = vector.shape_cast %59 : vector<8xf32> to vector<8x1xf32>
    %61 = vector.broadcast %60 : vector<8x1xf32> to vector<8x8xf32>
    %62 = arith.subf %58, %61 : vector<8x8xf32>
    %63 = math.exp %62 : vector<8x8xf32>
    %cst_24 = arith.constant dense<0.000000e+00> : vector<8xf32>
    %64 = vector.multi_reduction <add>, %63, %cst_24 [1] : vector<8x8xf32> to vector<8xf32>
    %65 = vector.shape_cast %64 : vector<8xf32> to vector<8x1xf32>
    %66 = tpu.reciprocal %65 {approx = true} : vector<8x1xf32> -> vector<8x1xf32>
    %67 = vector.broadcast %66 : vector<8x1xf32> to vector<8x8xf32>
    %68 = arith.mulf %63, %67 : vector<8x8xf32>
    %c0_25 = arith.constant 0 : index
    %c2 = arith.constant 2 : index
    %c0_26 = arith.constant 0 : index
    %c0_27 = arith.constant 0 : index
    %69 = vector.load %arg14[%c0_25, %c2, %c0_26, %c0_27] : memref<1x4x8x8xf32, #tpu.memory_space<vmem>>, vector<1x1x8x8xf32>
    %70 = vector.shape_cast %69 : vector<1x1x8x8xf32> to vector<8x8xf32>
    %71 = vector.shape_cast %68 : vector<8x8xf32> to vector<1x1x8x8xf32>
    tpu.vector_store %arg14[%c0_25, %c2, %c0_26, %c0_27], %71 {strides = array<i32>} : memref<1x4x8x8xf32, #tpu.memory_space<vmem>>, vector<1x1x8x8xf32>,
    %72 = arith.truncf %68 : vector<8x8xf32> to vector<8x8xbf16>
    %cst_28 = arith.constant dense<0.000000e+00> : vector<8x8xf32>
    %73 = tpu.matmul %72, %55, %cst_28 {dimension_numbers = #tpu.dot_dimension_numbers<[1], [0], [0], [1], [0, 0, 1, 1], [], []>} : vector<8x8xbf16>, vector<8x8xbf16>, vector<8x8xf32> -> vector<8x8xf32>
    %74 = arith.truncf %73 : vector<8x8xf32> to vector<8x8xbf16>
    %75 = vector.extract_strided_slice %6 {offsets = [0, 24], sizes = [8, 8], strides = [1, 1]} : vector<8x32xbf16> to vector<8x8xbf16>
    %76 = vector.extract_strided_slice %7 {offsets = [0, 24], sizes = [8, 8], strides = [1, 1]} : vector<8x32xbf16> to vector<8x8xbf16>
    %77 = vector.extract_strided_slice %8 {offsets = [0, 24], sizes = [8, 8], strides = [1, 1]} : vector<8x32xbf16> to vector<8x8xbf16>
    %cst_29 = arith.constant dense<0.000000e+00> : vector<8x8xf32>
    %78 = tpu.matmul %75, %76, %cst_29 {dimension_numbers = #tpu.dot_dimension_numbers<[1], [1], [0], [0], [0, 0, 1, 0], [], []>} : vector<8x8xbf16>, vector<8x8xbf16>, vector<8x8xf32> -> vector<8x8xf32>
    %cst_30 = arith.constant 0.353553385 : f32
    %79 = vector.broadcast %cst_30 : f32 to vector<8x8xf32>
    %80 = arith.mulf %78, %79 : vector<8x8xf32>
    %cst_31 = arith.constant dense<0xFF800000> : vector<8xf32>
    %81 = vector.multi_reduction <maximumf>, %80, %cst_31 [1] : vector<8x8xf32> to vector<8xf32>
    %82 = vector.shape_cast %81 : vector<8xf32> to vector<8x1xf32>
    %83 = vector.broadcast %82 : vector<8x1xf32> to vector<8x8xf32>
    %84 = arith.subf %80, %83 : vector<8x8xf32>
    %85 = math.exp %84 : vector<8x8xf32>
    %cst_32 = arith.constant dense<0.000000e+00> : vector<8xf32>
    %86 = vector.multi_reduction <add>, %85, %cst_32 [1] : vector<8x8xf32> to vector<8xf32>
    %87 = vector.shape_cast %86 : vector<8xf32> to vector<8x1xf32>
    %88 = tpu.reciprocal %87 {approx = true} : vector<8x1xf32> -> vector<8x1xf32>
    %89 = vector.broadcast %88 : vector<8x1xf32> to vector<8x8xf32>
    %90 = arith.mulf %85, %89 : vector<8x8xf32>
    %c0_33 = arith.constant 0 : index
    %c3 = arith.constant 3 : index
    %c0_34 = arith.constant 0 : index
    %c0_35 = arith.constant 0 : index
    %91 = vector.load %arg14[%c0_33, %c3, %c0_34, %c0_35] : memref<1x4x8x8xf32, #tpu.memory_space<vmem>>, vector<1x1x8x8xf32>
    %92 = vector.shape_cast %91 : vector<1x1x8x8xf32> to vector<8x8xf32>
    %93 = vector.shape_cast %90 : vector<8x8xf32> to vector<1x1x8x8xf32>
    tpu.vector_store %arg14[%c0_33, %c3, %c0_34, %c0_35], %93 {strides = array<i32>} : memref<1x4x8x8xf32, #tpu.memory_space<vmem>>, vector<1x1x8x8xf32>,
    %94 = arith.truncf %90 : vector<8x8xf32> to vector<8x8xbf16>
    %cst_36 = arith.constant dense<0.000000e+00> : vector<8x8xf32>
    %95 = tpu.matmul %94, %77, %cst_36 {dimension_numbers = #tpu.dot_dimension_numbers<[1], [0], [0], [1], [0, 0, 1, 1], [], []>} : vector<8x8xbf16>, vector<8x8xbf16>, vector<8x8xf32> -> vector<8x8xf32>
    %96 = arith.truncf %95 : vector<8x8xf32> to vector<8x8xbf16>
    %97 = tpu.concatenate %30, %52, %74, %96 in 1 : vector<8x8xbf16>, vector<8x8xbf16>, vector<8x8xbf16>, vector<8x8xbf16> -> vector<8x32xbf16>
    %c0_37 = arith.constant 0 : index
    %c0_38 = arith.constant 0 : index
    %98 = vector.load %arg8[%c0_37, %c0_38] : memref<32x32xbf16, #tpu.memory_space<vmem>>, vector<32x32xbf16>
    %cst_39 = arith.constant dense<0.000000e+00> : vector<8x32xf32>
    %99 = tpu.matmul %97, %98, %cst_39 {dimension_numbers = #tpu.dot_dimension_numbers<[1], [0], [0], [1], [0, 0, 1, 1], [], []>} : vector<8x32xbf16>, vector<32x32xbf16>, vector<8x32xf32> -> vector<8x32xf32>
    %c0_40 = arith.constant 0 : index
    %c0_41 = arith.constant 0 : index
    %100 = vector.load %arg12[%c0_40, %c0_41] : memref<1x32xf32, #tpu.memory_space<vmem>>, vector<1x32xf32>
    %101 = vector.broadcast %100 : vector<1x32xf32> to vector<8x32xf32>
    %102 = arith.addf %99, %101 : vector<8x32xf32>
    %c0_42 = arith.constant 0 : index
    %c0_43 = arith.constant 0 : index
    %c0_44 = arith.constant 0 : index
    %103 = vector.load %arg13[%c0_42, %c0_43, %c0_44] : memref<1x8x32xf32, #tpu.memory_space<vmem>>, vector<1x8x32xf32>
    %104 = vector.shape_cast %103 : vector<1x8x32xf32> to vector<8x32xf32>
    %105 = vector.shape_cast %102 : vector<8x32xf32> to vector<1x8x32xf32>
    tpu.vector_store %arg13[%c0_42, %c0_43, %c0_44], %105 {strides = array<i32>} : memref<1x8x32xf32, #tpu.memory_space<vmem>>, vector<1x8x32xf32>,
    return
  }
  func.func @transform_0(%arg0: i32, %arg1: i32) -> (i32, i32, i32) {
    %c0_i32 = arith.constant 0 : i32
    %c0_i32_0 = arith.constant 0 : i32
    %c0_i32_1 = arith.constant 0 : i32
    return %arg0, %c0_i32, %c0_i32_0 : i32, i32, i32
  }
  func.func @transform_1(%arg0: i32, %arg1: i32) -> (i32, i32, i32) {
    %c0_i32 = arith.constant 0 : i32
    %c0_i32_0 = arith.constant 0 : i32
    %c0_i32_1 = arith.constant 0 : i32
    return %arg0, %c0_i32, %c0_i32_0 : i32, i32, i32
  }
  func.func @transform_2(%arg0: i32, %arg1: i32) -> (i32, i32, i32) {
    %c0_i32 = arith.constant 0 : i32
    %c0_i32_0 = arith.constant 0 : i32
    %c0_i32_1 = arith.constant 0 : i32
    return %arg0, %c0_i32, %c0_i32_0 : i32, i32, i32
  }
  func.func @transform_3(%arg0: i32, %arg1: i32) -> (i32, i32) {
    %c0_i32 = arith.constant 0 : i32
    %c0_i32_0 = arith.constant 0 : i32
    %c0_i32_1 = arith.constant 0 : i32
    return %c0_i32, %c0_i32_0 : i32, i32
  }
  func.func @transform_4(%arg0: i32, %arg1: i32) -> (i32, i32) {
    %c0_i32 = arith.constant 0 : i32
    %c0_i32_0 = arith.constant 0 : i32
    %c0_i32_1 = arith.constant 0 : i32
    return %c0_i32, %c0_i32_0 : i32, i32
  }
  func.func @transform_5(%arg0: i32, %arg1: i32) -> (i32, i32) {
    %c0_i32 = arith.constant 0 : i32
    %c0_i32_0 = arith.constant 0 : i32
    %c0_i32_1 = arith.constant 0 : i32
    return %c0_i32, %c0_i32_0 : i32, i32
  }
  func.func @transform_6(%arg0: i32, %arg1: i32) -> (i32, i32) {
    %c0_i32 = arith.constant 0 : i32
    %c0_i32_0 = arith.constant 0 : i32
    %c0_i32_1 = arith.constant 0 : i32
    return %c0_i32, %c0_i32_0 : i32, i32
  }
  func.func @transform_7(%arg0: i32, %arg1: i32) -> (i32, i32) {
    %c0_i32 = arith.constant 0 : i32
    %c0_i32_0 = arith.constant 0 : i32
    %c0_i32_1 = arith.constant 0 : i32
    return %c0_i32, %c0_i32_0 : i32, i32
  }
  func.func @transform_8(%arg0: i32, %arg1: i32) -> (i32, i32) {
    %c0_i32 = arith.constant 0 : i32
    %c0_i32_0 = arith.constant 0 : i32
    %c0_i32_1 = arith.constant 0 : i32
    return %c0_i32, %c0_i32_0 : i32, i32
  }
  func.func @transform_9(%arg0: i32, %arg1: i32) -> (i32, i32) {
    %c0_i32 = arith.constant 0 : i32
    %c0_i32_0 = arith.constant 0 : i32
    %c0_i32_1 = arith.constant 0 : i32
    return %c0_i32, %c0_i32_0 : i32, i32
  }
  func.func @transform_10(%arg0: i32, %arg1: i32) -> (i32, i32) {
    %c0_i32 = arith.constant 0 : i32
    %c0_i32_0 = arith.constant 0 : i32
    %c0_i32_1 = arith.constant 0 : i32
    return %c0_i32, %c0_i32_0 : i32, i32
  }
  func.func @transform_11(%arg0: i32, %arg1: i32) -> (i32, i32, i32) {
    %c0_i32 = arith.constant 0 : i32
    %c0_i32_0 = arith.constant 0 : i32
    return %arg0, %arg1, %c0_i32 : i32, i32, i32
  }
  func.func @transform_12(%arg0: i32, %arg1: i32) -> (i32, i32, i32, i32) {
    %c0_i32 = arith.constant 0 : i32
    %c0_i32_0 = arith.constant 0 : i32
    %c0_i32_1 = arith.constant 0 : i32
    return %arg0, %c0_i32, %arg1, %c0_i32_0 : i32, i32, i32, i32
  }
}

</mosaic_0001>

<llo_original>
// kernel: tpu_custom_call.1
$region0: #{tpu_custom_call.1}
  #allocation0 [shape = 'u32[]', space=smem, size = 0x4, offset = 0x4, fixed_abs, tag = 'smem constant byte address 0x4 - core index']
  #allocation1 [shape = 'u32[144,128]{1,0:T(1,128)}', space=vmem, size = 0x12000, scoped, tag = 'internal scratch']
  #allocation2 [shape = 'bf16[8,32]{1,0:T(8,128)(2,1)}', space=vmem, size = 0x800, scoped, tag = 'scratch operand']
  #allocation3 [shape = 'bf16[8,32]{1,0:T(8,128)(2,1)}', space=vmem, size = 0x800, scoped, tag = 'scratch operand']
  #allocation4 [shape = 'bf16[8,32]{1,0:T(8,128)(2,1)}', space=vmem, size = 0x800, scoped, tag = 'scratch operand']
  %s0 = inlined_call_operand.hbm [shape: f32[2,8,32], index: 0, kind: input, shape index: {}]
  %s1 = inlined_call_operand.hbm [shape: f32[2,8,32], index: 1, kind: input, shape index: {}]
  %s2 = inlined_call_operand.hbm [shape: f32[2,8,32], index: 2, kind: input, shape index: {}]
  %s3 = inlined_call_operand.hbm [shape: bf16[32,32], index: 3, kind: input, shape index: {}]
  %s4 = inlined_call_operand.hbm [shape: bf16[32,32], index: 4, kind: input, shape index: {}]
  %s5 = inlined_call_operand.hbm [shape: bf16[32,32], index: 5, kind: input, shape index: {}]
  %s6 = inlined_call_operand.hbm [shape: bf16[32,32], index: 6, kind: input, shape index: {}]
  %s7 = inlined_call_operand.hbm [shape: f32[1,32], index: 7, kind: input, shape index: {}]
  %s8 = inlined_call_operand.hbm [shape: f32[1,32], index: 8, kind: input, shape index: {}]
  %s9 = inlined_call_operand.hbm [shape: f32[1,32], index: 9, kind: input, shape index: {}]
  %s10 = inlined_call_operand.hbm [shape: f32[1,32], index: 10, kind: input, shape index: {}]
  %s11 = inlined_call_operand.hbm [shape: f32[2,8,32], index: 11, kind: output, shape index: {0}]
  %s12 = inlined_call_operand.hbm [shape: f32[2,4,8,8], index: 12, kind: output, shape index: {1}]
  %13 = xla_tuple %s11, %s12
  %s14 = sld [smem:[#allocation0]]
  $region133: #{tpu_custom_call.1} parent=0
    _
  %s16 = ssub.s32 1, %s14
  %s17 = scalar_select 0, %s16, %s14
  $region1: #{tpu_custom_call.1} parent=0
    #allocation5 [shape = 'u8[8192]{0}', space=vmem, size = 0x2000, scoped, tag = 'input window, operand 0']
    #allocation6 [shape = 's32[2]{0}', space=sflag, size = 0x8, scoped, tag = 'scoped memory for tpu_custom_call.1']
    #allocation7 [shape = 's32[2]{0}', space=sflag, size = 0x8, scoped, tag = 'scoped memory for tpu_custom_call.1']
    #allocation8 [shape = 'u8[8192]{0}', space=vmem, size = 0x2000, scoped, tag = 'input window, operand 1']
    #allocation9 [shape = 's32[2]{0}', space=sflag, size = 0x8, scoped, tag = 'scoped memory for tpu_custom_call.1']
    #allocation10 [shape = 'u8[8192]{0}', space=vmem, size = 0x2000, scoped, tag = 'input window, operand 2']
    #allocation11 [shape = 'u8[8192]{0}', space=vmem, size = 0x2000, scoped, tag = 'input window, operand 3, single buffered']
    #allocation12 [shape = 's32[1]{0}', space=sflag, size = 0x4, scoped, tag = 'scoped memory for tpu_custom_call.1']
    #allocation13 [shape = 'u8[8192]{0}', space=vmem, size = 0x2000, scoped, tag = 'input window, operand 4, single buffered']
    #allocation14 [shape = 'u8[8192]{0}', space=vmem, size = 0x2000, scoped, tag = 'input window, operand 5, single buffered']
    #allocation15 [shape = 's32[1]{0}', space=sflag, size = 0x4, scoped, tag = 'scoped memory for tpu_custom_call.1']
    #allocation16 [shape = 'u8[8192]{0}', space=vmem, size = 0x2000, scoped, tag = 'input window, operand 6, single buffered']
    #allocation17 [shape = 'u8[512]{0}', space=vmem, size = 0x400, scoped, tag = 'input window, operand 7, single buffered']
    #allocation18 [shape = 's32[1]{0}', space=sflag, size = 0x4, scoped, tag = 'scoped memory for tpu_custom_call.1']
    #allocation19 [shape = 'u8[512]{0}', space=vmem, size = 0x400, scoped, tag = 'input window, operand 8, single buffered']
    #allocation20 [shape = 'u8[512]{0}', space=vmem, size = 0x400, scoped, tag = 'input window, operand 9, single buffered']
    #allocation21 [shape = 's32[1]{0}', space=sflag, size = 0x4, scoped, tag = 'scoped memory for tpu_custom_call.1']
    #allocation22 [shape = 'u8[512]{0}', space=vmem, size = 0x400, scoped, tag = 'input window, operand 10, single buffered']
    #allocation23 [shape = 'u8[8192]{0}', space=vmem, size = 0x2000, scoped, tag = 'output window, operand 0']
    #allocation24 [shape = 'u8[32768]{0}', space=vmem, size = 0x8000, scoped, tag = 'output window, operand 1']
    #allocation25 [shape = 's32[2]{0}', space=sflag, size = 0x8, scoped, tag = 'scoped memory for tpu_custom_call.1']
    %18 = vsyncpa [#allocation6], 0
    %s19 = scalar_lea.sflag [#allocation6], 1
    %20 = vsyncpa %s19, 0
    %21 = vsyncpa [#allocation9], 0
    %s22 = scalar_lea.sflag [#allocation9], 1
    %23 = vsyncpa %s22, 0
    %24 = vsyncpa [#allocation12], 0
    %25 = vsyncpa [#allocation15], 0
    %26 = vsyncpa [#allocation18], 0
    %27 = vsyncpa [#allocation21], 0
    %28 = vsyncpa [#allocation7], 0
    %s29 = scalar_lea.sflag [#allocation7], 1
    %30 = vsyncpa %s29, 0
    %31 = vsyncpa [#allocation25], 0
    %s32 = scalar_lea.sflag [#allocation25], 1
    %33 = vsyncpa %s32, 0
    loop: start=0, step=1, limit=4
    $region2: #{tpu_custom_call.1} parent=1 // loop_pre_header
      _
    $region3: #{tpu_custom_call.1} parent=1 // loop_header
      %s35 = sphi 0, %s39
      %p36 = scmp.ge.s32.totalorder %s35, 4
      %s42 = sphi 0, %s54
      %s43 = sphi 0, %s50
      %s44 = sphi 0, %s42
      %s45 = sphi 0, %s43
      %s46 = sphi 0, %s44
      %s47 = sphi 0, %s45
      %s57 = sphi 0, %s59
      %s60 = sphi 0, %s57
      %s61 = sphi 0, %s60
      %s77 = sphi 0, %s61
      %s83 = sphi 0, %s85
      %s86 = sphi 0, %s83
      %s87 = sphi 0, %s86
      %s103 = sphi 0, %s87
      %s109 = sphi 0, %s111
      %s112 = sphi 0, %s109
      %s113 = sphi 0, %s112
      %s129 = sphi 0, %s113
      %s133 = sphi 0, %s133
      %s135 = sphi 0, %s133
      %s136 = sphi 0, %s135
      %s150 = sphi 0, %s136
      %s154 = sphi 0, %s154
      %s156 = sphi 0, %s154
      %s157 = sphi 0, %s156
      %s171 = sphi 0, %s157
      %s175 = sphi 0, %s175
      %s177 = sphi 0, %s175
      %s178 = sphi 0, %s177
      %s192 = sphi 0, %s178
      %s196 = sphi 0, %s196
      %s198 = sphi 0, %s196
      %s199 = sphi 0, %s198
      %s213 = sphi 0, %s199
      %s217 = sphi 0, %s217
      %s219 = sphi 0, %s217
      %s220 = sphi 0, %s219
      %s234 = sphi 0, %s220
      %s238 = sphi 0, %s238
      %s240 = sphi 0, %s238
      %s241 = sphi 0, %s240
      %s255 = sphi 0, %s241
      %s259 = sphi 0, %s259
      %s261 = sphi 0, %s259
      %s262 = sphi 0, %s261
      %s276 = sphi 0, %s262
      %s280 = sphi 0, %s280
      %s282 = sphi 0, %s280
      %s283 = sphi 0, %s282
      %s297 = sphi 0, %s283
      %s305 = sphi 0, %s307
      %s308 = sphi 0, %s305
      %s309 = sphi 0, %s308
      %s325 = sphi 0, %s309
      %s333 = sphi 0, %s335
      %s336 = sphi 0, %s333
      %s337 = sphi 0, %s336
      %s353 = sphi 0, %s337
    $region4: #{tpu_custom_call.1} parent=1 // loop_header_branch
      %38 = sbr.rel (%p36) target = $region8
    $region5: #{tpu_custom_call.1} parent=1 // loop_body
      %s40 = ssub.s32 %s35, 1
      %s41 = ssub.s32 %s35, 2
      %s48 = sadd.s32 1, %s43
      %p49 = scmp.ge.s32.totalorder %s48, 1
      %s50 = scalar_select %p49, 0, %s48
      %s51 = sadd.s32 1, %s42
      %s52 = scalar_select %p49, %s51, %s42
      %p53 = scmp.ge.s32.totalorder %s52, 2
      %s54 = scalar_select %p53, 0, %s52
      %s55 = ssub.s32 %s42, %s54
      %p56 = scmp.eq.s32.totalorder %s55, 0
      %s58 = sadd.s32 %s57, 1
      %s59 = scalar_select %p56, %s57, %s58
      %p62 = pneg %p56
      %p63 = scmp.eq.s32.totalorder %s35, 1
      %p64 = por %p62, %p63
      %p65 = scmp.ne.s32.totalorder %s57, %s60
      %p66 = scmp.eq.s32.totalorder %s35, 0
      %p67 = por %p65, %p66
      %p68 = scmp.ne.s32.totalorder %s57, %s60
      %p69 = scmp.eq.s32.totalorder %s40, 1
      %p70 = por %p68, %p69
      %p71 = scmp.ne.s32.totalorder %s60, %s61
      %p72 = scmp.eq.s32.totalorder %s40, 0
      %p73 = por %p71, %p72
      %p74 = scmp.ne.s32.totalorder %s60, %s61
      %p75 = scmp.eq.s32.totalorder %s41, 1
      %p76 = por %p74, %p75
      %p78 = scmp.ne.s32.totalorder %s61, %s77
      %p79 = scmp.eq.s32.totalorder %s41, 0
      %p80 = por %p78, %p79
      %s81 = ssub.s32 %s42, %s54
      %p82 = scmp.eq.s32.totalorder %s81, 0
      %s84 = sadd.s32 %s83, 1
      %s85 = scalar_select %p82, %s83, %s84
      %p88 = pneg %p82
      %p89 = scmp.eq.s32.totalorder %s35, 1
      %p90 = por %p88, %p89
      %p91 = scmp.ne.s32.totalorder %s83, %s86
      %p92 = scmp.eq.s32.totalorder %s35, 0
      %p93 = por %p91, %p92
      %p94 = scmp.ne.s32.totalorder %s83, %s86
      %p95 = scmp.eq.s32.totalorder %s40, 1
      %p96 = por %p94, %p95
      %p97 = scmp.ne.s32.totalorder %s86, %s87
      %p98 = scmp.eq.s32.totalorder %s40, 0
      %p99 = por %p97, %p98
      %p100 = scmp.ne.s32.totalorder %s86, %s87
      %p101 = scmp.eq.s32.totalorder %s41, 1
      %p102 = por %p100, %p101
      %p104 = scmp.ne.s32.totalorder %s87, %s103
      %p105 = scmp.eq.s32.totalorder %s41, 0
      %p106 = por %p104, %p105
      %s107 = ssub.s32 %s42, %s54
      %p108 = scmp.eq.s32.totalorder %s107, 0
      %s110 = sadd.s32 %s109, 1
      %s111 = scalar_select %p108, %s109, %s110
      %p114 = pneg %p108
      %p115 = scmp.eq.s32.totalorder %s35, 1
      %p116 = por %p114, %p115
      %p117 = scmp.ne.s32.totalorder %s109, %s112
      %p118 = scmp.eq.s32.totalorder %s35, 0
      %p119 = por %p117, %p118
      %p120 = scmp.ne.s32.totalorder %s109, %s112
      %p121 = scmp.eq.s32.totalorder %s40, 1
      %p122 = por %p120, %p121
      %p123 = scmp.ne.s32.totalorder %s112, %s113
      %p124 = scmp.eq.s32.totalorder %s40, 0
      %p125 = por %p123, %p124
      %p126 = scmp.ne.s32.totalorder %s112, %s113
      %p127 = scmp.eq.s32.totalorder %s41, 1
      %p128 = por %p126, %p127
      %p130 = scmp.ne.s32.totalorder %s113, %s129
      %p131 = scmp.eq.s32.totalorder %s41, 0
      %p132 = por %p130, %p131
      %s134 = sadd.s32 %s133, 1
      %p137 = scmp.eq.s32.totalorder %s35, 1
      %p138 = scmp.ne.s32.totalorder %s133, %s135
      %p139 = scmp.eq.s32.totalorder %s35, 0
      %p140 = por %p138, %p139
      %p141 = scmp.ne.s32.totalorder %s133, %s135
      %p142 = scmp.eq.s32.totalorder %s40, 1
      %p143 = por %p141, %p142
      %p144 = scmp.ne.s32.totalorder %s135, %s136
      %p145 = scmp.eq.s32.totalorder %s40, 0
      %p146 = por %p144, %p145
      %p147 = scmp.ne.s32.totalorder %s135, %s136
      %p148 = scmp.eq.s32.totalorder %s41, 1
      %p149 = por %p147, %p148
      %p151 = scmp.ne.s32.totalorder %s136, %s150
      %p152 = scmp.eq.s32.totalorder %s41, 0
      %p153 = por %p151, %p152
      %s155 = sadd.s32 %s154, 1
      %p158 = scmp.eq.s32.totalorder %s35, 1
      %p159 = scmp.ne.s32.totalorder %s154, %s156
      %p160 = scmp.eq.s32.totalorder %s35, 0
      %p161 = por %p159, %p160
      %p162 = scmp.ne.s32.totalorder %s154, %s156
      %p163 = scmp.eq.s32.totalorder %s40, 1
      %p164 = por %p162, %p163
      %p165 = scmp.ne.s32.totalorder %s156, %s157
      %p166 = scmp.eq.s32.totalorder %s40, 0
      %p167 = por %p165, %p166
      %p168 = scmp.ne.s32.totalorder %s156, %s157
      %p169 = scmp.eq.s32.totalorder %s41, 1
      %p170 = por %p168, %p169
      %p172 = scmp.ne.s32.totalorder %s157, %s171
      %p173 = scmp.eq.s32.totalorder %s41, 0
      %p174 = por %p172, %p173
      %s176 = sadd.s32 %s175, 1
      %p179 = scmp.eq.s32.totalorder %s35, 1
      %p180 = scmp.ne.s32.totalorder %s175, %s177
      %p181 = scmp.eq.s32.totalorder %s35, 0
      %p182 = por %p180, %p181
      %p183 = scmp.ne.s32.totalorder %s175, %s177
      %p184 = scmp.eq.s32.totalorder %s40, 1
      %p185 = por %p183, %p184
      %p186 = scmp.ne.s32.totalorder %s177, %s178
      %p187 = scmp.eq.s32.totalorder %s40, 0
      %p188 = por %p186, %p187
      %p189 = scmp.ne.s32.totalorder %s177, %s178
      %p190 = scmp.eq.s32.totalorder %s41, 1
      %p191 = por %p189, %p190
      %p193 = scmp.ne.s32.totalorder %s178, %s192
      %p194 = scmp.eq.s32.totalorder %s41, 0
      %p195 = por %p193, %p194
      %s197 = sadd.s32 %s196, 1
      %p200 = scmp.eq.s32.totalorder %s35, 1
      %p201 = scmp.ne.s32.totalorder %s196, %s198
      %p202 = scmp.eq.s32.totalorder %s35, 0
      %p203 = por %p201, %p202
      %p204 = scmp.ne.s32.totalorder %s196, %s198
      %p205 = scmp.eq.s32.totalorder %s40, 1
      %p206 = por %p204, %p205
      %p207 = scmp.ne.s32.totalorder %s198, %s199
      %p208 = scmp.eq.s32.totalorder %s40, 0
      %p209 = por %p207, %p208
      %p210 = scmp.ne.s32.totalorder %s198, %s199
      %p211 = scmp.eq.s32.totalorder %s41, 1
      %p212 = por %p210, %p211
      %p214 = scmp.ne.s32.totalorder %s199, %s213
      %p215 = scmp.eq.s32.totalorder %s41, 0
      %p216 = por %p214, %p215
      %s218 = sadd.s32 %s217, 1
      %p221 = scmp.eq.s32.totalorder %s35, 1
      %p222 = scmp.ne.s32.totalorder %s217, %s219
      %p223 = scmp.eq.s32.totalorder %s35, 0
      %p224 = por %p222, %p223
      %p225 = scmp.ne.s32.totalorder %s217, %s219
      %p226 = scmp.eq.s32.totalorder %s40, 1
      %p227 = por %p225, %p226
      %p228 = scmp.ne.s32.totalorder %s219, %s220
      %p229 = scmp.eq.s32.totalorder %s40, 0
      %p230 = por %p228, %p229
      %p231 = scmp.ne.s32.totalorder %s219, %s220
      %p232 = scmp.eq.s32.totalorder %s41, 1
      %p233 = por %p231, %p232
      %p235 = scmp.ne.s32.totalorder %s220, %s234
      %p236 = scmp.eq.s32.totalorder %s41, 0
      %p237 = por %p235, %p236
      %s239 = sadd.s32 %s238, 1
      %p242 = scmp.eq.s32.totalorder %s35, 1
      %p243 = scmp.ne.s32.totalorder %s238, %s240
      %p244 = scmp.eq.s32.totalorder %s35, 0
      %p245 = por %p243, %p244
      %p246 = scmp.ne.s32.totalorder %s238, %s240
      %p247 = scmp.eq.s32.totalorder %s40, 1
      %p248 = por %p246, %p247
      %p249 = scmp.ne.s32.totalorder %s240, %s241
      %p250 = scmp.eq.s32.totalorder %s40, 0
      %p251 = por %p249, %p250
      %p252 = scmp.ne.s32.totalorder %s240, %s241
      %p253 = scmp.eq.s32.totalorder %s41, 1
      %p254 = por %p252, %p253
      %p256 = scmp.ne.s32.totalorder %s241, %s255
      %p257 = scmp.eq.s32.totalorder %s41, 0
      %p258 = por %p256, %p257
      %s260 = sadd.s32 %s259, 1
      %p263 = scmp.eq.s32.totalorder %s35, 1
      %p264 = scmp.ne.s32.totalorder %s259, %s261
      %p265 = scmp.eq.s32.totalorder %s35, 0
      %p266 = por %p264, %p265
      %p267 = scmp.ne.s32.totalorder %s259, %s261
      %p268 = scmp.eq.s32.totalorder %s40, 1
      %p269 = por %p267, %p268
      %p270 = scmp.ne.s32.totalorder %s261, %s262
      %p271 = scmp.eq.s32.totalorder %s40, 0
      %p272 = por %p270, %p271
      %p273 = scmp.ne.s32.totalorder %s261, %s262
      %p274 = scmp.eq.s32.totalorder %s41, 1
      %p275 = por %p273, %p274
      %p277 = scmp.ne.s32.totalorder %s262, %s276
      %p278 = scmp.eq.s32.totalorder %s41, 0
      %p279 = por %p277, %p278
      %s281 = sadd.s32 %s280, 1
      %p284 = scmp.eq.s32.totalorder %s35, 1
      %p285 = scmp.ne.s32.totalorder %s280, %s282
      %p286 = scmp.eq.s32.totalorder %s35, 0
      %p287 = por %p285, %p286
      %p288 = scmp.ne.s32.totalorder %s280, %s282
      %p289 = scmp.eq.s32.totalorder %s40, 1
      %p290 = por %p288, %p289
      %p291 = scmp.ne.s32.totalorder %s282, %s283
      %p292 = scmp.eq.s32.totalorder %s40, 0
      %p293 = por %p291, %p292
      %p294 = scmp.ne.s32.totalorder %s282, %s283
      %p295 = scmp.eq.s32.totalorder %s41, 1
      %p296 = por %p294, %p295
      %p298 = scmp.ne.s32.totalorder %s283, %s297
      %p299 = scmp.eq.s32.totalorder %s41, 0
      %p300 = por %p298, %p299
      %s301 = ssub.s32 %s42, %s54
      %s302 = ssub.s32 %s43, %s50
      %s303 = sor.u32 %s301, %s302
      %p304 = scmp.eq.s32.totalorder %s303, 0
      %s306 = sadd.s32 %s305, 1
      %s307 = scalar_select %p304, %s305, %s306
      %p310 = pneg %p304
      %p311 = scmp.eq.s32.totalorder %s35, 1
      %p312 = por %p310, %p311
      %p313 = scmp.ne.s32.totalorder %s305, %s308
      %p314 = scmp.eq.s32.totalorder %s35, 0
      %p315 = por %p313, %p314
      %p316 = scmp.ne.s32.totalorder %s305, %s308
      %p317 = scmp.eq.s32.totalorder %s40, 1
      %p318 = por %p316, %p317
      %p319 = scmp.ne.s32.totalorder %s308, %s309
      %p320 = scmp.eq.s32.totalorder %s40, 0
      %p321 = por %p319, %p320
      %p322 = scmp.ne.s32.totalorder %s308, %s309
      %p323 = scmp.eq.s32.totalorder %s41, 1
      %p324 = por %p322, %p323
      %p326 = scmp.ne.s32.totalorder %s309, %s325
      %p327 = scmp.eq.s32.totalorder %s41, 0
      %p328 = por %p326, %p327
      %s329 = ssub.s32 %s42, %s54
      %s330 = ssub.s32 %s43, %s50
      %s331 = sor.u32 %s329, %s330
      %p332 = scmp.eq.s32.totalorder %s331, 0
      %s334 = sadd.s32 %s333, 1
      %s335 = scalar_select %p332, %s333, %s334
      %p338 = pneg %p332
      %p339 = scmp.eq.s32.totalorder %s35, 1
      %p340 = por %p338, %p339
      %p341 = scmp.ne.s32.totalorder %s333, %s336
      %p342 = scmp.eq.s32.totalorder %s35, 0
      %p343 = por %p341, %p342
      %p344 = scmp.ne.s32.totalorder %s333, %s336
      %p345 = scmp.eq.s32.totalorder %s40, 1
      %p346 = por %p344, %p345
      %p347 = scmp.ne.s32.totalorder %s336, %s337
      %p348 = scmp.eq.s32.totalorder %s40, 0
      %p349 = por %p347, %p348
      %p350 = scmp.ne.s32.totalorder %s336, %s337
      %p351 = scmp.eq.s32.totalorder %s41, 1
      %p352 = por %p350, %p351
      %p354 = scmp.ne.s32.totalorder %s337, %s353
      %p355 = scmp.eq.s32.totalorder %s41, 0
      %p356 = por %p354, %p355
      %p357 = scmp.le.s32.totalorder 1, %s35
      %p358 = scmp.lt.s32.totalorder %s35, 3
      %p359 = pnand %p357, %p358
      %p360 = pneg %p359
      // Predicated region
      $region9: #{tpu_custom_call.1} parent=5 // pred_check
        _
      $region10: #{tpu_custom_call.1} parent=5 // pred_check_branch
        %362 = sbr.rel (%p359) target = $region12
      $region11: #{tpu_custom_call.1} parent=5 // pred_region
        %s363 = ssub.s32 %s35, 1
        // Predicated region
        $region13: #{tpu_custom_call.1} parent=11 // pred_check
          %p364 = pneg %p146
        $region14: #{tpu_custom_call.1} parent=11 // pred_check_branch
          %366 = sbr.rel (%p364) target = $region16
        $region15: #{tpu_custom_call.1} parent=11 // pred_region
          %s368 = ssub.s32 256, 256
          %369 = vsyncadd [#allocation12], %s368
          %s370 = sshll.u32 [#allocation11], 4
          %s371 = int_to_ptr.vmem [resolvable:$true] %s370
          %376 = dma.hbm_to_vmem [thread:$0]  %s3, 256, %s371, [#allocation12], 64, 64, 4
        $region16: #{tpu_custom_call.1} parent=11 // pred_fallthru
          _
        // Predicated region
        $region17: #{tpu_custom_call.1} parent=11 // pred_check
          %p377 = pneg %p167
        $region18: #{tpu_custom_call.1} parent=11 // pred_check_branch
          %379 = sbr.rel (%p377) target = $region20
        $region19: #{tpu_custom_call.1} parent=11 // pred_region
          %s381 = ssub.s32 256, 256
          %382 = vsyncadd [#allocation12], %s381
          %s383 = sshll.u32 [#allocation13], 4
          %s384 = int_to_ptr.vmem [resolvable:$true] %s383
          %389 = dma.hbm_to_vmem [thread:$0]  %s4, 256, %s384, [#allocation12], 64, 64, 4
        $region20: #{tpu_custom_call.1} parent=11 // pred_fallthru
          _
        // Predicated region
        $region21: #{tpu_custom_call.1} parent=11 // pred_check
          %p390 = pneg %p188
        $region22: #{tpu_custom_call.1} parent=11 // pred_check_branch
          %392 = sbr.rel (%p390) target = $region24
        $region23: #{tpu_custom_call.1} parent=11 // pred_region
          %s394 = ssub.s32 256, 256
          %395 = vsyncadd [#allocation15], %s394
          %s396 = sshll.u32 [#allocation14], 4
          %s397 = int_to_ptr.vmem [resolvable:$true] %s396
          %402 = dma.hbm_to_vmem [thread:$0]  %s5, 256, %s397, [#allocation15], 64, 64, 4
        $region24: #{tpu_custom_call.1} parent=11 // pred_fallthru
          _
        // Predicated region
        $region25: #{tpu_custom_call.1} parent=11 // pred_check
          %p403 = pneg %p209
        $region26: #{tpu_custom_call.1} parent=11 // pred_check_branch
          %405 = sbr.rel (%p403) target = $region28
        $region27: #{tpu_custom_call.1} parent=11 // pred_region
          %s407 = ssub.s32 256, 256
          %408 = vsyncadd [#allocation15], %s407
          %s409 = sshll.u32 [#allocation16], 4
          %s410 = int_to_ptr.vmem [resolvable:$true] %s409
          %415 = dma.hbm_to_vmem [thread:$0]  %s6, 256, %s410, [#allocation15], 64, 64, 4
        $region28: #{tpu_custom_call.1} parent=11 // pred_fallthru
          _
        // Predicated region
        $region29: #{tpu_custom_call.1} parent=11 // pred_check
          %p416 = pneg %p230
        $region30: #{tpu_custom_call.1} parent=11 // pred_check_branch
          %418 = sbr.rel (%p416) target = $region32
        $region31: #{tpu_custom_call.1} parent=11 // pred_region
          %s420 = ssub.s32 16, 16
          %421 = vsyncadd [#allocation18], %s420
          %s423 = sshll.u32 [#allocation17], 4
          %s424 = int_to_ptr.vmem [resolvable:$true] %s423
          %426 = dma.hbm_to_vmem [thread:$0]  %s7, 16, %s424, [#allocation18]
        $region32: #{tpu_custom_call.1} parent=11 // pred_fallthru
          _
        // Predicated region
        $region33: #{tpu_custom_call.1} parent=11 // pred_check
          %p427 = pneg %p251
        $region34: #{tpu_custom_call.1} parent=11 // pred_check_branch
          %429 = sbr.rel (%p427) target = $region36
        $region35: #{tpu_custom_call.1} parent=11 // pred_region
          %s431 = ssub.s32 16, 16
          %432 = vsyncadd [#allocation18], %s431
          %s434 = sshll.u32 [#allocation19], 4
          %s435 = int_to_ptr.vmem [resolvable:$true] %s434
          %437 = dma.hbm_to_vmem [thread:$0]  %s8, 16, %s435, [#allocation18]
        $region36: #{tpu_custom_call.1} parent=11 // pred_fallthru
          _
        // Predicated region
        $region37: #{tpu_custom_call.1} parent=11 // pred_check
          %p438 = pneg %p272
        $region38: #{tpu_custom_call.1} parent=11 // pred_check_branch
          %440 = sbr.rel (%p438) target = $region40
        $region39: #{tpu_custom_call.1} parent=11 // pred_region
          %s442 = ssub.s32 16, 16
          %443 = vsyncadd [#allocation21], %s442
          %s445 = sshll.u32 [#allocation20], 4
          %s446 = int_to_ptr.vmem [resolvable:$true] %s445
          %448 = dma.hbm_to_vmem [thread:$0]  %s9, 16, %s446, [#allocation21]
        $region40: #{tpu_custom_call.1} parent=11 // pred_fallthru
          _
        // Predicated region
        $region41: #{tpu_custom_call.1} parent=11 // pred_check
          %p449 = pneg %p293
        $region42: #{tpu_custom_call.1} parent=11 // pred_check_branch
          %451 = sbr.rel (%p449) target = $region44
        $region43: #{tpu_custom_call.1} parent=11 // pred_region
          %s453 = ssub.s32 16, 16
          %454 = vsyncadd [#allocation21], %s453
          %s456 = sshll.u32 [#allocation22], 4
          %s457 = int_to_ptr.vmem [resolvable:$true] %s456
          %459 = dma.hbm_to_vmem [thread:$0]  %s10, 16, %s457, [#allocation21]
        $region44: #{tpu_custom_call.1} parent=11 // pred_fallthru
          _
      $region12: #{tpu_custom_call.1} parent=5 // pred_fallthru
        _
      %p460 = scmp.lt.s32.totalorder %s35, 2
      // Predicated region
      $region45: #{tpu_custom_call.1} parent=5 // pred_check
        %p461 = pneg %p460
      $region46: #{tpu_custom_call.1} parent=5 // pred_check_branch
        %463 = sbr.rel (%p461) target = $region48
      $region47: #{tpu_custom_call.1} parent=5 // pred_region
        // Predicated region
        $region49: #{tpu_custom_call.1} parent=47 // pred_check
          %p464 = pneg %p67
        $region50: #{tpu_custom_call.1} parent=47 // pred_check_branch
          %466 = sbr.rel (%p464) target = $region52
        $region51: #{tpu_custom_call.1} parent=47 // pred_region
          %s467 = sand.u32 %s57, 1
          %s468 = scalar_lea.sflag [#allocation6], %s467
          %s469 = sand.u32 %s57, 1
          %s470 = smul.addr %s469, 8
          %s471 = scalar_lea.vmem [#allocation5], %s470
          %s473 = ssub.s32 128, 128
          %474 = vsyncadd %s468, %s473
          %s475 = smul.addr %s42, 128
          %s476 = scalar_lea.hbm %s0, %s475
          %s478 = sshll.u32 %s471, 4
          %s479 = int_to_ptr.vmem [resolvable:$true] %s478
          %481 = dma.hbm_to_vmem [thread:$0]  %s476, 128, %s479, %s468
        $region52: #{tpu_custom_call.1} parent=47 // pred_fallthru
          _
        // Predicated region
        $region53: #{tpu_custom_call.1} parent=47 // pred_check
          %p482 = pneg %p93
        $region54: #{tpu_custom_call.1} parent=47 // pred_check_branch
          %484 = sbr.rel (%p482) target = $region56
        $region55: #{tpu_custom_call.1} parent=47 // pred_region
          %s485 = sand.u32 %s35, 1
          %s486 = scalar_lea.sflag [#allocation9], %s485
          %s487 = sand.u32 %s83, 1
          %s488 = smul.addr %s487, 8
          %s489 = scalar_lea.vmem [#allocation8], %s488
          %s491 = ssub.s32 128, 128
          %492 = vsyncadd %s486, %s491
          %s493 = smul.addr %s42, 128
          %s494 = scalar_lea.hbm %s1, %s493
          %s496 = sshll.u32 %s489, 4
          %s497 = int_to_ptr.vmem [resolvable:$true] %s496
          %499 = dma.hbm_to_vmem [thread:$0]  %s494, 128, %s497, %s486
        $region56: #{tpu_custom_call.1} parent=47 // pred_fallthru
          _
        // Predicated region
        $region57: #{tpu_custom_call.1} parent=47 // pred_check
          %p500 = pneg %p119
        $region58: #{tpu_custom_call.1} parent=47 // pred_check_branch
          %502 = sbr.rel (%p500) target = $region60
        $region59: #{tpu_custom_call.1} parent=47 // pred_region
          %s503 = sand.u32 %s35, 1
          %s504 = scalar_lea.sflag [#allocation9], %s503
          %s505 = sand.u32 %s109, 1
          %s506 = smul.addr %s505, 8
          %s507 = scalar_lea.vmem [#allocation10], %s506
          %s509 = ssub.s32 128, 128
          %510 = vsyncadd %s504, %s509
          %s511 = smul.addr %s42, 128
          %s512 = scalar_lea.hbm %s2, %s511
          %s514 = sshll.u32 %s507, 4
          %s515 = int_to_ptr.vmem [resolvable:$true] %s514
          %517 = dma.hbm_to_vmem [thread:$0]  %s512, 128, %s515, %s504
        $region60: #{tpu_custom_call.1} parent=47 // pred_fallthru
          _
      $region48: #{tpu_custom_call.1} parent=5 // pred_fallthru
        _
      %p518 = scmp.le.s32.totalorder 1, %s35
      %p519 = scmp.lt.s32.totalorder %s35, 3
      %p520 = pnand %p518, %p519
      %p521 = pneg %p520
      // Predicated region
      $region61: #{tpu_custom_call.1} parent=5 // pred_check
        _
      $region62: #{tpu_custom_call.1} parent=5 // pred_check_branch
        %523 = sbr.rel (%p520) target = $region64
      $region63: #{tpu_custom_call.1} parent=5 // pred_region
        %s524 = ssub.s32 %s35, 1
        %s525 = sand.u32 %s60, 1
        %s526 = scalar_lea.sflag [#allocation6], %s525
        %s527 = sand.u32 %s60, 1
        %s528 = smul.addr %s527, 8
        %s529 = scalar_lea.vmem [#allocation5], %s528
        // Predicated region
        $region65: #{tpu_custom_call.1} parent=63 // pred_check
          %p530 = pneg %p73
        $region66: #{tpu_custom_call.1} parent=63 // pred_check_branch
          %532 = sbr.rel (%p530) target = $region68
        $region67: #{tpu_custom_call.1} parent=63 // pred_region
          %533 = dma.done %s526, 128
        $region68: #{tpu_custom_call.1} parent=63 // pred_fallthru
          _
        %s534 = sand.u32 %s40, 1
        %s535 = scalar_lea.sflag [#allocation9], %s534
        %s536 = sand.u32 %s86, 1
        %s537 = smul.addr %s536, 8
        %s538 = scalar_lea.vmem [#allocation8], %s537
        // Predicated region
        $region69: #{tpu_custom_call.1} parent=63 // pred_check
          %p539 = pneg %p99
        $region70: #{tpu_custom_call.1} parent=63 // pred_check_branch
          %541 = sbr.rel (%p539) target = $region72
        $region71: #{tpu_custom_call.1} parent=63 // pred_region
          %542 = dma.done %s535, 128
        $region72: #{tpu_custom_call.1} parent=63 // pred_fallthru
          _
        %s543 = sand.u32 %s40, 1
        %s544 = scalar_lea.sflag [#allocation9], %s543
        %s545 = sand.u32 %s112, 1
        %s546 = smul.addr %s545, 8
        %s547 = scalar_lea.vmem [#allocation10], %s546
        // Predicated region
        $region73: #{tpu_custom_call.1} parent=63 // pred_check
          %p548 = pneg %p125
        $region74: #{tpu_custom_call.1} parent=63 // pred_check_branch
          %550 = sbr.rel (%p548) target = $region76
        $region75: #{tpu_custom_call.1} parent=63 // pred_region
          %551 = dma.done %s544, 128
        $region76: #{tpu_custom_call.1} parent=63 // pred_fallthru
          _
        // Predicated region
        $region77: #{tpu_custom_call.1} parent=63 // pred_check
          %p552 = pneg %p146
        $region78: #{tpu_custom_call.1} parent=63 // pred_check_branch
          %554 = sbr.rel (%p552) target = $region80
        $region79: #{tpu_custom_call.1} parent=63 // pred_region
          %555 = dma.done [#allocation12], 256
        $region80: #{tpu_custom_call.1} parent=63 // pred_fallthru
          _
        // Predicated region
        $region81: #{tpu_custom_call.1} parent=63 // pred_check
          %p556 = pneg %p167
        $region82: #{tpu_custom_call.1} parent=63 // pred_check_branch
          %558 = sbr.rel (%p556) target = $region84
        $region83: #{tpu_custom_call.1} parent=63 // pred_region
          %559 = dma.done [#allocation12], 256
        $region84: #{tpu_custom_call.1} parent=63 // pred_fallthru
          _
        // Predicated region
        $region85: #{tpu_custom_call.1} parent=63 // pred_check
          %p560 = pneg %p188
        $region86: #{tpu_custom_call.1} parent=63 // pred_check_branch
          %562 = sbr.rel (%p560) target = $region88
        $region87: #{tpu_custom_call.1} parent=63 // pred_region
          %563 = dma.done [#allocation15], 256
        $region88: #{tpu_custom_call.1} parent=63 // pred_fallthru
          _
        // Predicated region
        $region89: #{tpu_custom_call.1} parent=63 // pred_check
          %p564 = pneg %p209
        $region90: #{tpu_custom_call.1} parent=63 // pred_check_branch
          %566 = sbr.rel (%p564) target = $region92
        $region91: #{tpu_custom_call.1} parent=63 // pred_region
          %567 = dma.done [#allocation15], 256
        $region92: #{tpu_custom_call.1} parent=63 // pred_fallthru
          _
        // Predicated region
        $region93: #{tpu_custom_call.1} parent=63 // pred_check
          %p568 = pneg %p230
        $region94: #{tpu_custom_call.1} parent=63 // pred_check_branch
          %570 = sbr.rel (%p568) target = $region96
        $region95: #{tpu_custom_call.1} parent=63 // pred_region
          %571 = dma.done [#allocation18], 16
        $region96: #{tpu_custom_call.1} parent=63 // pred_fallthru
          _
        // Predicated region
        $region97: #{tpu_custom_call.1} parent=63 // pred_check
          %p572 = pneg %p251
        $region98: #{tpu_custom_call.1} parent=63 // pred_check_branch
          %574 = sbr.rel (%p572) target = $region100
        $region99: #{tpu_custom_call.1} parent=63 // pred_region
          %575 = dma.done [#allocation18], 16
        $region100: #{tpu_custom_call.1} parent=63 // pred_fallthru
          _
        // Predicated region
        $region101: #{tpu_custom_call.1} parent=63 // pred_check
          %p576 = pneg %p272
        $region102: #{tpu_custom_call.1} parent=63 // pred_check_branch
          %578 = sbr.rel (%p576) target = $region104
        $region103: #{tpu_custom_call.1} parent=63 // pred_region
          %579 = dma.done [#allocation21], 16
        $region104: #{tpu_custom_call.1} parent=63 // pred_fallthru
          _
        // Predicated region
        $region105: #{tpu_custom_call.1} parent=63 // pred_check
          %p580 = pneg %p293
        $region106: #{tpu_custom_call.1} parent=63 // pred_check_branch
          %582 = sbr.rel (%p580) target = $region108
        $region107: #{tpu_custom_call.1} parent=63 // pred_region
          %583 = dma.done [#allocation21], 16
        $region108: #{tpu_custom_call.1} parent=63 // pred_fallthru
          _
        %s584 = sand.u32 %s60, 1
        %s585 = scalar_lea.sflag [#allocation6], %s584
        %s586 = sand.u32 %s60, 1
        %s587 = smul.addr %s586, 8
        %s588 = scalar_lea.vmem [#allocation5], %s587
        %p589 = pneg %p73
        %p590 = pneg %p70
        %s591 = sand.u32 %s40, 1
        %s592 = scalar_lea.sflag [#allocation9], %s591
        %s593 = sand.u32 %s86, 1
        %s594 = smul.addr %s593, 8
        %s595 = scalar_lea.vmem [#allocation8], %s594
        %p596 = pneg %p99
        %p597 = pneg %p96
        %s598 = sand.u32 %s40, 1
        %s599 = scalar_lea.sflag [#allocation9], %s598
        %s600 = sand.u32 %s112, 1
        %s601 = smul.addr %s600, 8
        %s602 = scalar_lea.vmem [#allocation10], %s601
        %p603 = pneg %p125
        %p604 = pneg %p122
        %p605 = pneg %p146
        %p606 = pneg %p143
        %p607 = pneg %p167
        %p608 = pneg %p164
        %p609 = pneg %p188
        %p610 = pneg %p185
        %p611 = pneg %p209
        %p612 = pneg %p206
        %p613 = pneg %p230
        %p614 = pneg %p227
        %p615 = pneg %p251
        %p616 = pneg %p248
        %p617 = pneg %p272
        %p618 = pneg %p269
        %p619 = pneg %p293
        %p620 = pneg %p290
        %p621 = pneg %p321
        %p622 = pneg %p318
        %s623 = sand.u32 %s308, 1
        %s624 = scalar_lea.sflag [#allocation7], %s623
        %s625 = sand.u32 %s308, 1
        %s626 = smul.addr %s625, 8
        %s627 = scalar_lea.vmem [#allocation23], %s626
        %p628 = pneg %p349
        %p629 = pneg %p346
        %s630 = sand.u32 %s336, 1
        %s631 = scalar_lea.sflag [#allocation25], %s630
        %s632 = sand.u32 %s336, 1
        %s633 = smul.addr %s632, 32
        %s634 = scalar_lea.vmem [#allocation24], %s633
        %p636 = scmp.eq.s32.totalorder %s45, 0
        // Predicated region
        $region109: #{tpu_custom_call.1} parent=63 // pred_check
          %p637 = pneg %p636
        $region110: #{tpu_custom_call.1} parent=63 // pred_check_branch
          %639 = sbr.rel (%p637) target = $region112
        $region111: #{tpu_custom_call.1} parent=63 // pred_region
          %v640 = vld [vmem:[%s529] sm:$0xff]
          %v641 = vpack.c.bf16 %v640, %v640
          %v642 = vld [vmem:[%s538] sm:$0xff]
          %v643 = vpack.c.bf16 %v642, %v642
          %v644 = vld [vmem:[%s547] sm:$0xff]
          %v645 = vpack.c.bf16 %v644, %v644
          %v646 = vld [vmem:[#allocation11] sm:$0xf]
          %v647 = vld [vmem:[#allocation11 + $0x4] sm:$0xf]
          %v648 = vld [vmem:[#allocation11 + $0x8] sm:$0xf]
          %v649 = vld [vmem:[#allocation11 + $0xc] sm:$0xf]
          %v650 = vld [vmem:[#allocation17] sm:$0x1]
          %v652 = vlaneseq
          %v653 = vshrl.u32 %v652, 7
          %v654 = vsub.s32 0, %v653
          %v655 = vrot.slane %v650, %v654
          %v661 = vunpack.c.l.b16 %v646
          %v662 = vunpack.c.l.b16 %v647
          %v663 = vunpack.c.l.b16 %v648
          %v664 = vunpack.c.l.b16 %v649
          %v665 = vpack.c.b16 %v662, %v661
          %v666 = vpack.c.b16 %v664, %v663
          %vm669 = vcmask 261120
          %v671 = vsel %vm669, %v641, 0
          %673 = vmatprep.subr.bf16.mxu0 0
          %674 = vmatpush1.bf16.msra.mxu0 %v665
          %675 = vmatprep.subr.bf16.mxu0 0
          %676 = vmatpush1.bf16.msra.mxu0 %v666
          %677 = vmatprep.subr.bf16.mxu0 0
          %678 = vmatpush1.bf16.msra.mxu0 0
          %679 = vmatprep.subr.bf16.mxu0 0
          %680 = vmatpush1.bf16.msra.mxu0 0
          %681 = vmatprep.subr.bf16.mxu0 0
          %682 = vmatpush1.bf16.msra.mxu0 0
          %683 = vmatprep.subr.bf16.mxu0 0
          %684 = vmatpush1.bf16.msra.mxu0 0
          %685 = vmatprep.subr.bf16.mxu0 0
          %686 = vmatpush1.bf16.msra.mxu0 0
          %687 = vmatprep.subr.bf16.mxu0 0
          %688 = vmatpush1.bf16.msra.mxu0 0
          %689 = vmatprep.subr.bf16.mxu0 0
          %690 = vmatpush1.bf16.msra.mxu0 0
          %691 = vmatprep.subr.bf16.mxu0 0
          %692 = vmatpush1.bf16.msra.mxu0 0
          %693 = vmatprep.subr.bf16.mxu0 0
          %694 = vmatpush1.bf16.msra.mxu0 0
          %695 = vmatprep.subr.bf16.mxu0 0
          %696 = vmatpush1.bf16.msra.mxu0 0
          %697 = vmatprep.subr.bf16.mxu0 0
          %698 = vmatpush1.bf16.msra.mxu0 0
          %699 = vmatprep.subr.bf16.mxu0 0
          %700 = vmatpush1.bf16.msra.mxu0 0
          %701 = vmatprep.subr.bf16.mxu0 0
          %702 = vmatpush1.bf16.msra.mxu0 0
          %703 = vmatprep.subr.bf16.mxu0 0
          %704 = vmatpush1.bf16.msra.mxu0 0
          %705 = vmatprep.mubr.bf16.mxu0 0
          %706 = vmatmul.mubr.bf16.gmra.mrb[0].mxu0 %v671
          %v707 = vpop.f32.mrb[0].mxu0
          %v708 = vadd.f32 %v655, %v707
          %v709 = vpop.f32.mrb[0].mxu0
          %v710 = vpop.f32.mrb[0].mxu0
          %v711 = vpop.f32.mrb[0].mxu0
          %712 = vdwg.mxu0
          %v713 = vpack.c.bf16 %v708, %v708
          %vm714 = vcmask 257024
          %715 = vst.msk [vmem:[#allocation2] sm:$0xf] %vm714, %v713
          %v716 = vld [vmem:[#allocation13] sm:$0xf]
          %v717 = vld [vmem:[#allocation13 + $0x4] sm:$0xf]
          %v718 = vld [vmem:[#allocation13 + $0x8] sm:$0xf]
          %v719 = vld [vmem:[#allocation13 + $0xc] sm:$0xf]
          %v720 = vld [vmem:[#allocation19] sm:$0x1]
          %v722 = vlaneseq
          %v723 = vshrl.u32 %v722, 7
          %v724 = vsub.s32 0, %v723
          %v725 = vrot.slane %v720, %v724
          %v731 = vunpack.c.l.b16 %v716
          %v732 = vunpack.c.l.b16 %v717
          %v733 = vunpack.c.l.b16 %v718
          %v734 = vunpack.c.l.b16 %v719
          %v735 = vpack.c.b16 %v732, %v731
          %v736 = vpack.c.b16 %v734, %v733
          %v740 = vsel %vm669, %v643, 0
          %742 = vmatprep.subr.bf16.mxu0 0
          %743 = vmatpush1.bf16.msra.mxu0 %v735
          %744 = vmatprep.subr.bf16.mxu0 0
          %745 = vmatpush1.bf16.msra.mxu0 %v736
          %746 = vmatprep.subr.bf16.mxu0 0
          %747 = vmatpush1.bf16.msra.mxu0 0
          %748 = vmatprep.subr.bf16.mxu0 0
          %749 = vmatpush1.bf16.msra.mxu0 0
          %750 = vmatprep.subr.bf16.mxu0 0
          %751 = vmatpush1.bf16.msra.mxu0 0
          %752 = vmatprep.subr.bf16.mxu0 0
          %753 = vmatpush1.bf16.msra.mxu0 0
          %754 = vmatprep.subr.bf16.mxu0 0
          %755 = vmatpush1.bf16.msra.mxu0 0
          %756 = vmatprep.subr.bf16.mxu0 0
          %757 = vmatpush1.bf16.msra.mxu0 0
          %758 = vmatprep.subr.bf16.mxu0 0
          %759 = vmatpush1.bf16.msra.mxu0 0
          %760 = vmatprep.subr.bf16.mxu0 0
          %761 = vmatpush1.bf16.msra.mxu0 0
          %762 = vmatprep.subr.bf16.mxu0 0
          %763 = vmatpush1.bf16.msra.mxu0 0
          %764 = vmatprep.subr.bf16.mxu0 0
          %765 = vmatpush1.bf16.msra.mxu0 0
          %766 = vmatprep.subr.bf16.mxu0 0
          %767 = vmatpush1.bf16.msra.mxu0 0
          %768 = vmatprep.subr.bf16.mxu0 0
          %769 = vmatpush1.bf16.msra.mxu0 0
          %770 = vmatprep.subr.bf16.mxu0 0
          %771 = vmatpush1.bf16.msra.mxu0 0
          %772 = vmatprep.subr.bf16.mxu0 0
          %773 = vmatpush1.bf16.msra.mxu0 0
          %774 = vmatprep.mubr.bf16.mxu0 0
          %775 = vmatmul.mubr.bf16.gmra.mrb[0].mxu0 %v740
          %v776 = vpop.f32.mrb[0].mxu0
          %v777 = vadd.f32 %v725, %v776
          %v778 = vpop.f32.mrb[0].mxu0
          %v779 = vpop.f32.mrb[0].mxu0
          %v780 = vpop.f32.mrb[0].mxu0
          %781 = vdwg.mxu0
          %v782 = vpack.c.bf16 %v777, %v777
          %783 = vst.msk [vmem:[#allocation3] sm:$0xf] %vm714, %v782
          %v784 = vld [vmem:[#allocation14] sm:$0xf]
          %v785 = vld [vmem:[#allocation14 + $0x4] sm:$0xf]
          %v786 = vld [vmem:[#allocation14 + $0x8] sm:$0xf]
          %v787 = vld [vmem:[#allocation14 + $0xc] sm:$0xf]
          %v788 = vld [vmem:[#allocation20] sm:$0x1]
          %v790 = vlaneseq
          %v791 = vshrl.u32 %v790, 7
          %v792 = vsub.s32 0, %v791
          %v793 = vrot.slane %v788, %v792
          %v799 = vunpack.c.l.b16 %v784
          %v800 = vunpack.c.l.b16 %v785
          %v801 = vunpack.c.l.b16 %v786
          %v802 = vunpack.c.l.b16 %v787
          %v803 = vpack.c.b16 %v800, %v799
          %v804 = vpack.c.b16 %v802, %v801
          %v808 = vsel %vm669, %v645, 0
          %810 = vmatprep.subr.bf16.mxu0 0
          %811 = vmatpush1.bf16.msra.mxu0 %v803
          %812 = vmatprep.subr.bf16.mxu0 0
          %813 = vmatpush1.bf16.msra.mxu0 %v804
          %814 = vmatprep.subr.bf16.mxu0 0
          %815 = vmatpush1.bf16.msra.mxu0 0
          %816 = vmatprep.subr.bf16.mxu0 0
          %817 = vmatpush1.bf16.msra.mxu0 0
          %818 = vmatprep.subr.bf16.mxu0 0
          %819 = vmatpush1.bf16.msra.mxu0 0
          %820 = vmatprep.subr.bf16.mxu0 0
          %821 = vmatpush1.bf16.msra.mxu0 0
          %822 = vmatprep.subr.bf16.mxu0 0
          %823 = vmatpush1.bf16.msra.mxu0 0
          %824 = vmatprep.subr.bf16.mxu0 0
          %825 = vmatpush1.bf16.msra.mxu0 0
          %826 = vmatprep.subr.bf16.mxu0 0
          %827 = vmatpush1.bf16.msra.mxu0 0
          %828 = vmatprep.subr.bf16.mxu0 0
          %829 = vmatpush1.bf16.msra.mxu0 0
          %830 = vmatprep.subr.bf16.mxu0 0
          %831 = vmatpush1.bf16.msra.mxu0 0
          %832 = vmatprep.subr.bf16.mxu0 0
          %833 = vmatpush1.bf16.msra.mxu0 0
          %834 = vmatprep.subr.bf16.mxu0 0
          %835 = vmatpush1.bf16.msra.mxu0 0
          %836 = vmatprep.subr.bf16.mxu0 0
          %837 = vmatpush1.bf16.msra.mxu0 0
          %838 = vmatprep.subr.bf16.mxu0 0
          %839 = vmatpush1.bf16.msra.mxu0 0
          %840 = vmatprep.subr.bf16.mxu0 0
          %841 = vmatpush1.bf16.msra.mxu0 0
          %842 = vmatprep.mubr.bf16.mxu0 0
          %843 = vmatmul.mubr.bf16.gmra.mrb[0].mxu0 %v808
          %v844 = vpop.f32.mrb[0].mxu0
          %v845 = vadd.f32 %v793, %v844
          %v846 = vpop.f32.mrb[0].mxu0
          %v847 = vpop.f32.mrb[0].mxu0
          %v848 = vpop.f32.mrb[0].mxu0
          %849 = vdwg.mxu0
          %v850 = vpack.c.bf16 %v845, %v845
          %851 = vst.msk [vmem:[#allocation4] sm:$0xf] %vm714, %v850
        $region112: #{tpu_custom_call.1} parent=63 // pred_fallthru
          _
        %s852 = smul.u32 %s45, 8
        %s853 = sshra.s32 %s852, 3
        %s854 = sand.u32 %s852, 7
        %s855 = smul.addr %s853, 4
        %s856 = scalar_lea.vmem [#allocation2], %s855
        %v857 = vld [vmem:[%s856] sm:$0xf]
        %v858 = vld [vmem:[#allocation3] sm:$0xf]
        %v859 = vld [vmem:[#allocation4] sm:$0xf]
        %vm860 = vcmask 64512
        %v862 = vsel %vm860, %v857, 0
        %v865 = vsel %vm860, %v858, 0
        %867 = vmatprep.subr.bf16.mxu0 0
        %868 = vmatpush1.bf16.xpose.msra.mxu0 %v865
        %869 = vmatprep.subr.bf16.mxu0 0
        %870 = vmatpush1.bf16.xpose.msra.mxu0 0
        %871 = vmatprep.subr.bf16.mxu0 0
        %872 = vmatpush1.bf16.xpose.msra.mxu0 0
        %873 = vmatprep.subr.bf16.mxu0 0
        %874 = vmatpush1.bf16.xpose.msra.mxu0 0
        %875 = vmatprep.subr.bf16.mxu0 0
        %876 = vmatpush1.bf16.xpose.msra.mxu0 0
        %877 = vmatprep.subr.bf16.mxu0 0
        %878 = vmatpush1.bf16.xpose.msra.mxu0 0
        %879 = vmatprep.subr.bf16.mxu0 0
        %880 = vmatpush1.bf16.xpose.msra.mxu0 0
        %881 = vmatprep.subr.bf16.mxu0 0
        %882 = vmatpush1.bf16.xpose.msra.mxu0 0
        %883 = vmatprep.subr.bf16.mxu0 0
        %884 = vmatpush1.bf16.xpose.msra.mxu0 0
        %885 = vmatprep.subr.bf16.mxu0 0
        %886 = vmatpush1.bf16.xpose.msra.mxu0 0
        %887 = vmatprep.subr.bf16.mxu0 0
        %888 = vmatpush1.bf16.xpose.msra.mxu0 0
        %889 = vmatprep.subr.bf16.mxu0 0
        %890 = vmatpush1.bf16.xpose.msra.mxu0 0
        %891 = vmatprep.subr.bf16.mxu0 0
        %892 = vmatpush1.bf16.xpose.msra.mxu0 0
        %893 = vmatprep.subr.bf16.mxu0 0
        %894 = vmatpush1.bf16.xpose.msra.mxu0 0
        %895 = vmatprep.subr.bf16.mxu0 0
        %896 = vmatpush1.bf16.xpose.msra.mxu0 0
        %897 = vmatprep.subr.bf16.mxu0 0
        %898 = vmatpush1.bf16.xpose.msra.mxu0 0
        %899 = vmatprep.mubr.bf16.mxu0 0
        %900 = vmatmul.mubr.bf16.gmra.mrb[0].mxu0 %v862
        %v901 = vpop.f32.mrb[0].mxu0
        %v902 = vadd.f32 0.0, %v901
        %v903 = vpop.f32.mrb[0].mxu0
        %v904 = vpop.f32.mrb[0].mxu0
        %v905 = vpop.f32.mrb[0].mxu0
        %906 = vdwg.mxu0
        %v907 = vmul.f32 %v902, 0.35355338
        %v908 = vsel %vm860, %v907, -inf
        %909 = vmax.xlane.f32.xlu0 %v908
        %v910 = vpop.xlane.xlu0 %909
        %v911 = vsub.f32 %v907, %v910
        %v912 = vmul.f32 %v911, 1.442695
        %v913 = vpow.pop %v912
        %v914 = vsel %vm860, %v913, 0.0
        %915 = vadd.xlane.f32.xlu0 %v914
        %v916 = vpop.xlane.xlu0 %915
        %v917 = vrcp.pop %v916
        %v918 = vmul.f32 %v913, %v917
        %919 = vst.msk [vmem:[%s634] sm:$0xff] %vm860, %v918
        %v920 = vpack.c.bf16 %v918, %v918
        %v922 = vsel %vm860, %v920, 0
        %vm924 = vcmask 1043456
        %v926 = vsel %vm924, %v859, 0
        %928 = vmatprep.subr.bf16.mxu0 0
        %929 = vmatpush1.bf16.msra.mxu0 %v926
        %930 = vmatprep.subr.bf16.mxu0 0
        %931 = vmatpush1.bf16.msra.mxu0 0
        %932 = vmatprep.subr.bf16.mxu0 0
        %933 = vmatpush1.bf16.msra.mxu0 0
        %934 = vmatprep.subr.bf16.mxu0 0
        %935 = vmatpush1.bf16.msra.mxu0 0
        %936 = vmatprep.subr.bf16.mxu0 0
        %937 = vmatpush1.bf16.msra.mxu0 0
        %938 = vmatprep.subr.bf16.mxu0 0
        %939 = vmatpush1.bf16.msra.mxu0 0
        %940 = vmatprep.subr.bf16.mxu0 0
        %941 = vmatpush1.bf16.msra.mxu0 0
        %942 = vmatprep.subr.bf16.mxu0 0
        %943 = vmatpush1.bf16.msra.mxu0 0
        %944 = vmatprep.subr.bf16.mxu0 0
        %945 = vmatpush1.bf16.msra.mxu0 0
        %946 = vmatprep.subr.bf16.mxu0 0
        %947 = vmatpush1.bf16.msra.mxu0 0
        %948 = vmatprep.subr.bf16.mxu0 0
        %949 = vmatpush1.bf16.msra.mxu0 0
        %950 = vmatprep.subr.bf16.mxu0 0
        %951 = vmatpush1.bf16.msra.mxu0 0
        %952 = vmatprep.subr.bf16.mxu0 0
        %953 = vmatpush1.bf16.msra.mxu0 0
        %954 = vmatprep.subr.bf16.mxu0 0
        %955 = vmatpush1.bf16.msra.mxu0 0
        %956 = vmatprep.subr.bf16.mxu0 0
        %957 = vmatpush1.bf16.msra.mxu0 0
        %958 = vmatprep.subr.bf16.mxu0 0
        %959 = vmatpush1.bf16.msra.mxu0 0
        %960 = vmatprep.mubr.bf16.mxu0 0
        %961 = vmatmul.mubr.bf16.gmra.mrb[0].mxu0 %v922
        %v962 = vpop.f32.mrb[0].mxu0
        %v963 = vadd.f32 0.0, %v962
        %v964 = vpop.f32.mrb[0].mxu0
        %v965 = vpop.f32.mrb[0].mxu0
        %v966 = vpop.f32.mrb[0].mxu0
        %967 = vdwg.mxu0
        %v968 = vpack.c.bf16 %v963, %v963
        %v970 = vunpack.c.l.b16 %v857
        %v971 = vpack.c.b16 %v970, %v970
        %972 = vrot.lane.b32.xlu0 %v971, 120
        %v973 = vpop.permute.xlu0 %972
        %v975 = vunpack.c.l.b16 %v858
        %v976 = vpack.c.b16 %v975, %v975
        %977 = vrot.lane.b32.xlu0 %v976, 120
        %v978 = vpop.permute.xlu0 %977
        %v980 = vsel %vm860, %v973, 0
        %v983 = vsel %vm860, %v978, 0
        %985 = vmatprep.subr.bf16.mxu0 0
        %986 = vmatpush1.bf16.xpose.msra.mxu0 %v983
        %987 = vmatprep.subr.bf16.mxu0 0
        %988 = vmatpush1.bf16.xpose.msra.mxu0 0
        %989 = vmatprep.subr.bf16.mxu0 0
        %990 = vmatpush1.bf16.xpose.msra.mxu0 0
        %991 = vmatprep.subr.bf16.mxu0 0
        %992 = vmatpush1.bf16.xpose.msra.mxu0 0
        %993 = vmatprep.subr.bf16.mxu0 0
        %994 = vmatpush1.bf16.xpose.msra.mxu0 0
        %995 = vmatprep.subr.bf16.mxu0 0
        %996 = vmatpush1.bf16.xpose.msra.mxu0 0
        %997 = vmatprep.subr.bf16.mxu0 0
        %998 = vmatpush1.bf16.xpose.msra.mxu0 0
        %999 = vmatprep.subr.bf16.mxu0 0
        %1000 = vmatpush1.bf16.xpose.msra.mxu0 0
        %1001 = vmatprep.subr.bf16.mxu0 0
        %1002 = vmatpush1.bf16.xpose.msra.mxu0 0
        %1003 = vmatprep.subr.bf16.mxu0 0
        %1004 = vmatpush1.bf16.xpose.msra.mxu0 0
        %1005 = vmatprep.subr.bf16.mxu0 0
        %1006 = vmatpush1.bf16.xpose.msra.mxu0 0
        %1007 = vmatprep.subr.bf16.mxu0 0
        %1008 = vmatpush1.bf16.xpose.msra.mxu0 0
        %1009 = vmatprep.subr.bf16.mxu0 0
        %1010 = vmatpush1.bf16.xpose.msra.mxu0 0
        %1011 = vmatprep.subr.bf16.mxu0 0
        %1012 = vmatpush1.bf16.xpose.msra.mxu0 0
        %1013 = vmatprep.subr.bf16.mxu0 0
        %1014 = vmatpush1.bf16.xpose.msra.mxu0 0
        %1015 = vmatprep.subr.bf16.mxu0 0
        %1016 = vmatpush1.bf16.xpose.msra.mxu0 0
        %1017 = vmatprep.mubr.bf16.mxu0 0
        %1018 = vmatmul.mubr.bf16.gmra.mrb[0].mxu0 %v980
        %v1019 = vpop.f32.mrb[0].mxu0
        %v1020 = vadd.f32 0.0, %v1019
        %v1021 = vpop.f32.mrb[0].mxu0
        %v1022 = vpop.f32.mrb[0].mxu0
        %v1023 = vpop.f32.mrb[0].mxu0
        %1024 = vdwg.mxu0
        %v1025 = vmul.f32 %v1020, 0.35355338
        %v1026 = vsel %vm860, %v1025, -inf
        %1027 = vmax.xlane.f32.xlu0 %v1026
        %v1028 = vpop.xlane.xlu0 %1027
        %v1029 = vsub.f32 %v1025, %v1028
        %v1030 = vmul.f32 %v1029, 1.442695
        %v1031 = vpow.pop %v1030
        %v1032 = vsel %vm860, %v1031, 0.0
        %1033 = vadd.xlane.f32.xlu0 %v1032
        %v1034 = vpop.xlane.xlu0 %1033
        %v1035 = vrcp.pop %v1034
        %v1036 = vmul.f32 %v1031, %v1035
        %s1037 = scalar_lea.vmem %s634, 8 [#allocation24]
        %1038 = vst.msk [vmem:[%s1037] sm:$0xff] %vm860, %v1036
        %v1039 = vpack.c.bf16 %v1036, %v1036
        %v1041 = vunpack.c.l.b16 %v859
        %v1042 = vpack.c.b16 %v1041, %v1041
        %1043 = vrot.lane.b32.xlu0 %v1042, 120
        %v1044 = vpop.permute.xlu0 %1043
        %v1046 = vsel %vm860, %v1039, 0
        %v1049 = vsel %vm924, %v1044, 0
        %1051 = vmatprep.subr.bf16.mxu0 0
        %1052 = vmatpush1.bf16.msra.mxu0 %v1049
        %1053 = vmatprep.subr.bf16.mxu0 0
        %1054 = vmatpush1.bf16.msra.mxu0 0
        %1055 = vmatprep.subr.bf16.mxu0 0
        %1056 = vmatpush1.bf16.msra.mxu0 0
        %1057 = vmatprep.subr.bf16.mxu0 0
        %1058 = vmatpush1.bf16.msra.mxu0 0
        %1059 = vmatprep.subr.bf16.mxu0 0
        %1060 = vmatpush1.bf16.msra.mxu0 0
        %1061 = vmatprep.subr.bf16.mxu0 0
        %1062 = vmatpush1.bf16.msra.mxu0 0
        %1063 = vmatprep.subr.bf16.mxu0 0
        %1064 = vmatpush1.bf16.msra.mxu0 0
        %1065 = vmatprep.subr.bf16.mxu0 0
        %1066 = vmatpush1.bf16.msra.mxu0 0
        %1067 = vmatprep.subr.bf16.mxu0 0
        %1068 = vmatpush1.bf16.msra.mxu0 0
        %1069 = vmatprep.subr.bf16.mxu0 0
        %1070 = vmatpush1.bf16.msra.mxu0 0
        %1071 = vmatprep.subr.bf16.mxu0 0
        %1072 = vmatpush1.bf16.msra.mxu0 0
        %1073 = vmatprep.subr.bf16.mxu0 0
        %1074 = vmatpush1.bf16.msra.mxu0 0
        %1075 = vmatprep.subr.bf16.mxu0 0
        %1076 = vmatpush1.bf16.msra.mxu0 0
        %1077 = vmatprep.subr.bf16.mxu0 0
        %1078 = vmatpush1.bf16.msra.mxu0 0
        %1079 = vmatprep.subr.bf16.mxu0 0
        %1080 = vmatpush1.bf16.msra.mxu0 0
        %1081 = vmatprep.subr.bf16.mxu0 0
        %1082 = vmatpush1.bf16.msra.mxu0 0
        %1083 = vmatprep.mubr.bf16.mxu0 0
        %1084 = vmatmul.mubr.bf16.gmra.mrb[0].mxu0 %v1046
        %v1085 = vpop.f32.mrb[0].mxu0
        %v1086 = vadd.f32 0.0, %v1085
        %v1087 = vpop.f32.mrb[0].mxu0
        %v1088 = vpop.f32.mrb[0].mxu0
        %v1089 = vpop.f32.mrb[0].mxu0
        %1090 = vdwg.mxu0
        %v1091 = vpack.c.bf16 %v1086, %v1086
        %1092 = vrot.lane.b32.xlu0 %v971, 112
        %v1093 = vpop.permute.xlu0 %1092
        %1094 = vrot.lane.b32.xlu0 %v976, 112
        %v1095 = vpop.permute.xlu0 %1094
        %v1097 = vsel %vm860, %v1093, 0
        %v1100 = vsel %vm860, %v1095, 0
        %1102 = vmatprep.subr.bf16.mxu0 0
        %1103 = vmatpush1.bf16.xpose.msra.mxu0 %v1100
        %1104 = vmatprep.subr.bf16.mxu0 0
        %1105 = vmatpush1.bf16.xpose.msra.mxu0 0
        %1106 = vmatprep.subr.bf16.mxu0 0
        %1107 = vmatpush1.bf16.xpose.msra.mxu0 0
        %1108 = vmatprep.subr.bf16.mxu0 0
        %1109 = vmatpush1.bf16.xpose.msra.mxu0 0
        %1110 = vmatprep.subr.bf16.mxu0 0
        %1111 = vmatpush1.bf16.xpose.msra.mxu0 0
        %1112 = vmatprep.subr.bf16.mxu0 0
        %1113 = vmatpush1.bf16.xpose.msra.mxu0 0
        %1114 = vmatprep.subr.bf16.mxu0 0
        %1115 = vmatpush1.bf16.xpose.msra.mxu0 0
        %1116 = vmatprep.subr.bf16.mxu0 0
        %1117 = vmatpush1.bf16.xpose.msra.mxu0 0
        %1118 = vmatprep.subr.bf16.mxu0 0
        %1119 = vmatpush1.bf16.xpose.msra.mxu0 0
        %1120 = vmatprep.subr.bf16.mxu0 0
        %1121 = vmatpush1.bf16.xpose.msra.mxu0 0
        %1122 = vmatprep.subr.bf16.mxu0 0
        %1123 = vmatpush1.bf16.xpose.msra.mxu0 0
        %1124 = vmatprep.subr.bf16.mxu0 0
        %1125 = vmatpush1.bf16.xpose.msra.mxu0 0
        %1126 = vmatprep.subr.bf16.mxu0 0
        %1127 = vmatpush1.bf16.xpose.msra.mxu0 0
        %1128 = vmatprep.subr.bf16.mxu0 0
        %1129 = vmatpush1.bf16.xpose.msra.mxu0 0
        %1130 = vmatprep.subr.bf16.mxu0 0
        %1131 = vmatpush1.bf16.xpose.msra.mxu0 0
        %1132 = vmatprep.subr.bf16.mxu0 0
        %1133 = vmatpush1.bf16.xpose.msra.mxu0 0
        %1134 = vmatprep.mubr.bf16.mxu0 0
        %1135 = vmatmul.mubr.bf16.gmra.mrb[0].mxu0 %v1097
        %v1136 = vpop.f32.mrb[0].mxu0
        %v1137 = vadd.f32 0.0, %v1136
        %v1138 = vpop.f32.mrb[0].mxu0
        %v1139 = vpop.f32.mrb[0].mxu0
        %v1140 = vpop.f32.mrb[0].mxu0
        %1141 = vdwg.mxu0
        %v1142 = vmul.f32 %v1137, 0.35355338
        %v1143 = vsel %vm860, %v1142, -inf
        %1144 = vmax.xlane.f32.xlu0 %v1143
        %v1145 = vpop.xlane.xlu0 %1144
        %v1146 = vsub.f32 %v1142, %v1145
        %v1147 = vmul.f32 %v1146, 1.442695
        %v1148 = vpow.pop %v1147
        %v1149 = vsel %vm860, %v1148, 0.0
        %1150 = vadd.xlane.f32.xlu0 %v1149
        %v1151 = vpop.xlane.xlu0 %1150
        %v1152 = vrcp.pop %v1151
        %v1153 = vmul.f32 %v1148, %v1152
        %s1154 = scalar_lea.vmem %s634, 16 [#allocation24]
        %1155 = vst.msk [vmem:[%s1154] sm:$0xff] %vm860, %v1153
        %v1156 = vpack.c.bf16 %v1153, %v1153
        %1157 = vrot.lane.b32.xlu0 %v1042, 112
        %v1158 = vpop.permute.xlu0 %1157
        %v1160 = vsel %vm860, %v1156, 0
        %v1163 = vsel %vm924, %v1158, 0
        %1165 = vmatprep.subr.bf16.mxu0 0
        %1166 = vmatpush1.bf16.msra.mxu0 %v1163
        %1167 = vmatprep.subr.bf16.mxu0 0
        %1168 = vmatpush1.bf16.msra.mxu0 0
        %1169 = vmatprep.subr.bf16.mxu0 0
        %1170 = vmatpush1.bf16.msra.mxu0 0
        %1171 = vmatprep.subr.bf16.mxu0 0
        %1172 = vmatpush1.bf16.msra.mxu0 0
        %1173 = vmatprep.subr.bf16.mxu0 0
        %1174 = vmatpush1.bf16.msra.mxu0 0
        %1175 = vmatprep.subr.bf16.mxu0 0
        %1176 = vmatpush1.bf16.msra.mxu0 0
        %1177 = vmatprep.subr.bf16.mxu0 0
        %1178 = vmatpush1.bf16.msra.mxu0 0
        %1179 = vmatprep.subr.bf16.mxu0 0
        %1180 = vmatpush1.bf16.msra.mxu0 0
        %1181 = vmatprep.subr.bf16.mxu0 0
        %1182 = vmatpush1.bf16.msra.mxu0 0
        %1183 = vmatprep.subr.bf16.mxu0 0
        %1184 = vmatpush1.bf16.msra.mxu0 0
        %1185 = vmatprep.subr.bf16.mxu0 0
        %1186 = vmatpush1.bf16.msra.mxu0 0
        %1187 = vmatprep.subr.bf16.mxu0 0
        %1188 = vmatpush1.bf16.msra.mxu0 0
        %1189 = vmatprep.subr.bf16.mxu0 0
        %1190 = vmatpush1.bf16.msra.mxu0 0
        %1191 = vmatprep.subr.bf16.mxu0 0
        %1192 = vmatpush1.bf16.msra.mxu0 0
        %1193 = vmatprep.subr.bf16.mxu0 0
        %1194 = vmatpush1.bf16.msra.mxu0 0
        %1195 = vmatprep.subr.bf16.mxu0 0
        %1196 = vmatpush1.bf16.msra.mxu0 0
        %1197 = vmatprep.mubr.bf16.mxu0 0
        %1198 = vmatmul.mubr.bf16.gmra.mrb[0].mxu0 %v1160
        %v1199 = vpop.f32.mrb[0].mxu0
        %v1200 = vadd.f32 0.0, %v1199
        %v1201 = vpop.f32.mrb[0].mxu0
        %v1202 = vpop.f32.mrb[0].mxu0
        %v1203 = vpop.f32.mrb[0].mxu0
        %1204 = vdwg.mxu0
        %v1205 = vpack.c.bf16 %v1200, %v1200
        %1206 = vrot.lane.b32.xlu0 %v971, 104
        %v1207 = vpop.permute.xlu0 %1206
        %1208 = vrot.lane.b32.xlu0 %v976, 104
        %v1209 = vpop.permute.xlu0 %1208
        %v1211 = vsel %vm860, %v1207, 0
        %v1214 = vsel %vm860, %v1209, 0
        %1216 = vmatprep.subr.bf16.mxu0 0
        %1217 = vmatpush1.bf16.xpose.msra.mxu0 %v1214
        %1218 = vmatprep.subr.bf16.mxu0 0
        %1219 = vmatpush1.bf16.xpose.msra.mxu0 0
        %1220 = vmatprep.subr.bf16.mxu0 0
        %1221 = vmatpush1.bf16.xpose.msra.mxu0 0
        %1222 = vmatprep.subr.bf16.mxu0 0
        %1223 = vmatpush1.bf16.xpose.msra.mxu0 0
        %1224 = vmatprep.subr.bf16.mxu0 0
        %1225 = vmatpush1.bf16.xpose.msra.mxu0 0
        %1226 = vmatprep.subr.bf16.mxu0 0
        %1227 = vmatpush1.bf16.xpose.msra.mxu0 0
        %1228 = vmatprep.subr.bf16.mxu0 0
        %1229 = vmatpush1.bf16.xpose.msra.mxu0 0
        %1230 = vmatprep.subr.bf16.mxu0 0
        %1231 = vmatpush1.bf16.xpose.msra.mxu0 0
        %1232 = vmatprep.subr.bf16.mxu0 0
        %1233 = vmatpush1.bf16.xpose.msra.mxu0 0
        %1234 = vmatprep.subr.bf16.mxu0 0
        %1235 = vmatpush1.bf16.xpose.msra.mxu0 0
        %1236 = vmatprep.subr.bf16.mxu0 0
        %1237 = vmatpush1.bf16.xpose.msra.mxu0 0
        %1238 = vmatprep.subr.bf16.mxu0 0
        %1239 = vmatpush1.bf16.xpose.msra.mxu0 0
        %1240 = vmatprep.subr.bf16.mxu0 0
        %1241 = vmatpush1.bf16.xpose.msra.mxu0 0
        %1242 = vmatprep.subr.bf16.mxu0 0
        %1243 = vmatpush1.bf16.xpose.msra.mxu0 0
        %1244 = vmatprep.subr.bf16.mxu0 0
        %1245 = vmatpush1.bf16.xpose.msra.mxu0 0
        %1246 = vmatprep.subr.bf16.mxu0 0
        %1247 = vmatpush1.bf16.xpose.msra.mxu0 0
        %1248 = vmatprep.mubr.bf16.mxu0 0
        %1249 = vmatmul.mubr.bf16.gmra.mrb[0].mxu0 %v1211
        %v1250 = vpop.f32.mrb[0].mxu0
        %v1251 = vadd.f32 0.0, %v1250
        %v1252 = vpop.f32.mrb[0].mxu0
        %v1253 = vpop.f32.mrb[0].mxu0
        %v1254 = vpop.f32.mrb[0].mxu0
        %1255 = vdwg.mxu0
        %v1256 = vmul.f32 %v1251, 0.35355338
        %v1257 = vsel %vm860, %v1256, -inf
        %1258 = vmax.xlane.f32.xlu0 %v1257
        %v1259 = vpop.xlane.xlu0 %1258
        %v1260 = vsub.f32 %v1256, %v1259
        %v1261 = vmul.f32 %v1260, 1.442695
        %v1262 = vpow.pop %v1261
        %v1263 = vsel %vm860, %v1262, 0.0
        %1264 = vadd.xlane.f32.xlu0 %v1263
        %v1265 = vpop.xlane.xlu0 %1264
        %v1266 = vrcp.pop %v1265
        %v1267 = vmul.f32 %v1262, %v1266
        %s1268 = scalar_lea.vmem %s634, 24 [#allocation24]
        %1269 = vst.msk [vmem:[%s1268] sm:$0xff] %vm860, %v1267
        %v1270 = vpack.c.bf16 %v1267, %v1267
        %1271 = vrot.lane.b32.xlu0 %v1042, 104
        %v1272 = vpop.permute.xlu0 %1271
        %v1274 = vsel %vm860, %v1270, 0
        %v1277 = vsel %vm924, %v1272, 0
        %1279 = vmatprep.subr.bf16.mxu0 0
        %1280 = vmatpush1.bf16.msra.mxu0 %v1277
        %1281 = vmatprep.subr.bf16.mxu0 0
        %1282 = vmatpush1.bf16.msra.mxu0 0
        %1283 = vmatprep.subr.bf16.mxu0 0
        %1284 = vmatpush1.bf16.msra.mxu0 0
        %1285 = vmatprep.subr.bf16.mxu0 0
        %1286 = vmatpush1.bf16.msra.mxu0 0
        %1287 = vmatprep.subr.bf16.mxu0 0
        %1288 = vmatpush1.bf16.msra.mxu0 0
        %1289 = vmatprep.subr.bf16.mxu0 0
        %1290 = vmatpush1.bf16.msra.mxu0 0
        %1291 = vmatprep.subr.bf16.mxu0 0
        %1292 = vmatpush1.bf16.msra.mxu0 0
        %1293 = vmatprep.subr.bf16.mxu0 0
        %1294 = vmatpush1.bf16.msra.mxu0 0
        %1295 = vmatprep.subr.bf16.mxu0 0
        %1296 = vmatpush1.bf16.msra.mxu0 0
        %1297 = vmatprep.subr.bf16.mxu0 0
        %1298 = vmatpush1.bf16.msra.mxu0 0
        %1299 = vmatprep.subr.bf16.mxu0 0
        %1300 = vmatpush1.bf16.msra.mxu0 0
        %1301 = vmatprep.subr.bf16.mxu0 0
        %1302 = vmatpush1.bf16.msra.mxu0 0
        %1303 = vmatprep.subr.bf16.mxu0 0
        %1304 = vmatpush1.bf16.msra.mxu0 0
        %1305 = vmatprep.subr.bf16.mxu0 0
        %1306 = vmatpush1.bf16.msra.mxu0 0
        %1307 = vmatprep.subr.bf16.mxu0 0
        %1308 = vmatpush1.bf16.msra.mxu0 0
        %1309 = vmatprep.subr.bf16.mxu0 0
        %1310 = vmatpush1.bf16.msra.mxu0 0
        %1311 = vmatprep.mubr.bf16.mxu0 0
        %1312 = vmatmul.mubr.bf16.gmra.mrb[0].mxu0 %v1274
        %v1313 = vpop.f32.mrb[0].mxu0
        %v1314 = vadd.f32 0.0, %v1313
        %v1315 = vpop.f32.mrb[0].mxu0
        %v1316 = vpop.f32.mrb[0].mxu0
        %v1317 = vpop.f32.mrb[0].mxu0
        %1318 = vdwg.mxu0
        %v1319 = vpack.c.bf16 %v1314, %v1314
        %1321 = vrot.lane.b32.xlu0 %v1091, 8
        %v1322 = vpop.permute.xlu0 %1321
        %1324 = vrot.lane.b32.xlu0 %v1205, 16
        %v1325 = vpop.permute.xlu0 %1324
        %1327 = vrot.lane.b32.xlu0 %v1319, 24
        %v1328 = vpop.permute.xlu0 %1327
        %v1331 = vsel %vm860, %v968, %v1322
        %vm1332 = vcmask 130048
        %v1334 = vsel %vm1332, %v1331, %v1325
        %vm1335 = vcmask 195584
        %v1337 = vsel %vm1335, %v1334, %v1328
        %v1338 = vld [vmem:[#allocation16] sm:$0xf]
        %v1339 = vld [vmem:[#allocation16 + $0x4] sm:$0xf]
        %v1340 = vld [vmem:[#allocation16 + $0x8] sm:$0xf]
        %v1341 = vld [vmem:[#allocation16 + $0xc] sm:$0xf]
        %v1342 = vld [vmem:[#allocation22] sm:$0x1]
        %v1344 = vlaneseq
        %v1345 = vshrl.u32 %v1344, 7
        %v1346 = vsub.s32 0, %v1345
        %v1347 = vrot.slane %v1342, %v1346
        %v1353 = vunpack.c.l.b16 %v1338
        %v1354 = vunpack.c.l.b16 %v1339
        %v1355 = vunpack.c.l.b16 %v1340
        %v1356 = vunpack.c.l.b16 %v1341
        %v1357 = vpack.c.b16 %v1354, %v1353
        %v1358 = vpack.c.b16 %v1356, %v1355
        %vm1361 = vcmask 261120
        %v1362 = vsel %vm1361, %v1337, 0
        %1364 = vmatprep.subr.bf16.mxu0 0
        %1365 = vmatpush1.bf16.msra.mxu0 %v1357
        %1366 = vmatprep.subr.bf16.mxu0 0
        %1367 = vmatpush1.bf16.msra.mxu0 %v1358
        %1368 = vmatprep.subr.bf16.mxu0 0
        %1369 = vmatpush1.bf16.msra.mxu0 0
        %1370 = vmatprep.subr.bf16.mxu0 0
        %1371 = vmatpush1.bf16.msra.mxu0 0
        %1372 = vmatprep.subr.bf16.mxu0 0
        %1373 = vmatpush1.bf16.msra.mxu0 0
        %1374 = vmatprep.subr.bf16.mxu0 0
        %1375 = vmatpush1.bf16.msra.mxu0 0
        %1376 = vmatprep.subr.bf16.mxu0 0
        %1377 = vmatpush1.bf16.msra.mxu0 0
        %1378 = vmatprep.subr.bf16.mxu0 0
        %1379 = vmatpush1.bf16.msra.mxu0 0
        %1380 = vmatprep.subr.bf16.mxu0 0
        %1381 = vmatpush1.bf16.msra.mxu0 0
        %1382 = vmatprep.subr.bf16.mxu0 0
        %1383 = vmatpush1.bf16.msra.mxu0 0
        %1384 = vmatprep.subr.bf16.mxu0 0
        %1385 = vmatpush1.bf16.msra.mxu0 0
        %1386 = vmatprep.subr.bf16.mxu0 0
        %1387 = vmatpush1.bf16.msra.mxu0 0
        %1388 = vmatprep.subr.bf16.mxu0 0
        %1389 = vmatpush1.bf16.msra.mxu0 0
        %1390 = vmatprep.subr.bf16.mxu0 0
        %1391 = vmatpush1.bf16.msra.mxu0 0
        %1392 = vmatprep.subr.bf16.mxu0 0
        %1393 = vmatpush1.bf16.msra.mxu0 0
        %1394 = vmatprep.subr.bf16.mxu0 0
        %1395 = vmatpush1.bf16.msra.mxu0 0
        %1396 = vmatprep.mubr.bf16.mxu0 0
        %1397 = vmatmul.mubr.bf16.gmra.mrb[0].mxu0 %v1362
        %v1398 = vpop.f32.mrb[0].mxu0
        %v1399 = vadd.f32 %v1347, %v1398
        %v1400 = vpop.f32.mrb[0].mxu0
        %v1401 = vpop.f32.mrb[0].mxu0
        %v1402 = vpop.f32.mrb[0].mxu0
        %1403 = vdwg.mxu0
        %1404 = vst.msk [vmem:[%s627] sm:$0xff] %vm1361, %v1399
        %s1405 = sand.u32 %s308, 1
        %s1406 = scalar_lea.sflag [#allocation7], %s1405
        %s1407 = sand.u32 %s308, 1
        %s1408 = smul.addr %s1407, 8
        %s1409 = scalar_lea.vmem [#allocation23], %s1408
        %s1410 = sand.u32 %s336, 1
        %s1411 = scalar_lea.sflag [#allocation25], %s1410
        %s1412 = sand.u32 %s336, 1
        %s1413 = smul.addr %s1412, 32
        %s1414 = scalar_lea.vmem [#allocation24], %s1413
        // Predicated region
        $region113: #{tpu_custom_call.1} parent=63 // pred_check
          %p1415 = pneg %p318
        $region114: #{tpu_custom_call.1} parent=63 // pred_check_branch
          %1417 = sbr.rel (%p1415) target = $region116
        $region115: #{tpu_custom_call.1} parent=63 // pred_region
          %s1419 = ssub.s32 128, 128
          %1420 = vsyncadd %s1406, %s1419
          %s1421 = sadd.s32 %s45, %s44
          %s1422 = smul.addr %s1421, 128
          %s1423 = scalar_lea.hbm %s11, %s1422
          %s1425 = sshll.u32 %s1409, 4
          %s1426 = int_to_ptr.vmem [resolvable:$true] %s1425
          %1428 = dma.vmem_to_hbm [thread:$0]  %s1426, 128, %s1423, %s1406
        $region116: #{tpu_custom_call.1} parent=63 // pred_fallthru
          _
        // Predicated region
        $region117: #{tpu_custom_call.1} parent=63 // pred_check
          %p1429 = pneg %p346
        $region118: #{tpu_custom_call.1} parent=63 // pred_check_branch
          %1431 = sbr.rel (%p1429) target = $region120
        $region119: #{tpu_custom_call.1} parent=63 // pred_region
          %s1433 = ssub.s32 512, 512
          %1434 = vsyncadd %s1411, %s1433
          %s1435 = smul.addr %s44, 4
          %s1436 = sadd.s32 %s45, %s1435
          %s1437 = smul.addr %s1436, 128
          %s1438 = scalar_lea.hbm %s12, %s1437
          %s1439 = sshll.u32 %s1414, 4
          %s1440 = int_to_ptr.vmem [resolvable:$true] %s1439
          %1445 = dma.vmem_to_hbm [thread:$0]  %s1440, 512, %s1438, %s1411, 128, 128, 8
        $region120: #{tpu_custom_call.1} parent=63 // pred_fallthru
          _
      $region64: #{tpu_custom_call.1} parent=5 // pred_fallthru
        _
      %p1446 = scmp.le.s32.totalorder 2, %s35
      // Predicated region
      $region121: #{tpu_custom_call.1} parent=5 // pred_check
        %p1447 = pneg %p1446
      $region122: #{tpu_custom_call.1} parent=5 // pred_check_branch
        %1449 = sbr.rel (%p1447) target = $region124
      $region123: #{tpu_custom_call.1} parent=5 // pred_region
        %s1450 = ssub.s32 %s35, 2
        // Predicated region
        $region125: #{tpu_custom_call.1} parent=123 // pred_check
          %p1451 = pneg %p324
        $region126: #{tpu_custom_call.1} parent=123 // pred_check_branch
          %1453 = sbr.rel (%p1451) target = $region128
        $region127: #{tpu_custom_call.1} parent=123 // pred_region
          %s1454 = sand.u32 %s309, 1
          %s1455 = scalar_lea.sflag [#allocation7], %s1454
          %s1456 = sand.u32 %s309, 1
          %s1457 = smul.addr %s1456, 8
          %s1458 = scalar_lea.vmem [#allocation23], %s1457
          %1459 = dma.done %s1455, 128
        $region128: #{tpu_custom_call.1} parent=123 // pred_fallthru
          _
        // Predicated region
        $region129: #{tpu_custom_call.1} parent=123 // pred_check
          %p1460 = pneg %p352
        $region130: #{tpu_custom_call.1} parent=123 // pred_check_branch
          %1462 = sbr.rel (%p1460) target = $region132
        $region131: #{tpu_custom_call.1} parent=123 // pred_region
          %s1463 = sand.u32 %s337, 1
          %s1464 = scalar_lea.sflag [#allocation25], %s1463
          %s1465 = sand.u32 %s337, 1
          %s1466 = smul.addr %s1465, 32
          %s1467 = scalar_lea.vmem [#allocation24], %s1466
          %1468 = dma.done %s1464, 512
        $region132: #{tpu_custom_call.1} parent=123 // pred_fallthru
          _
      $region124: #{tpu_custom_call.1} parent=5 // pred_fallthru
        _
    $region6: #{tpu_custom_call.1} parent=1 // loop_footer
      %s39 = sadd.s32 1, %s35
    $region7: #{tpu_custom_call.1} parent=1 // loop_footer_branch
      %34 = sbr.rel target = $region3
    $region8: #{tpu_custom_call.1} parent=1 // loop_exit
      _
    %1469 = vsyncpa [#allocation6], 1
    %s1470 = scalar_lea.sflag [#allocation6], 1
    %1471 = vsyncpa %s1470, 1
    %1472 = vsyncpa [#allocation9], 1
    %s1473 = scalar_lea.sflag [#allocation9], 1
    %1474 = vsyncpa %s1473, 1
    %1475 = vsyncpa [#allocation12], 1
    %1476 = vsyncpa [#allocation15], 1
    %1477 = vsyncpa [#allocation18], 1
    %1478 = vsyncpa [#allocation21], 1
    %1479 = vsyncpa [#allocation7], 1
    %s1480 = scalar_lea.sflag [#allocation7], 1
    %1481 = vsyncpa %s1480, 1
    %1482 = vsyncpa [#allocation25], 1
    %s1483 = scalar_lea.sflag [#allocation25], 1
    %1484 = vsyncpa %s1483, 1

</llo_original>
